<compile_context>
chip_gen: v7x
topology: tpu7x:2x2x1
jax: 0.10.0
libtpu: 0.0.40
codegen_flags: <defaults>
</compile_context>

<pallas_src>
import jax
import jax.numpy as jnp
import numpy as np
from jax.experimental import pallas as pl
from jax.experimental.pallas import tpu as pltpu

LANE = 128


def _round_up(v, m):
    return -(-v // m) * m


def _hardswish(y):
    return y * jnp.clip(y + 3.0, 0.0, 6.0) * (1.0 / 6.0)


def _row_tile(M):
    if M >= 512:
        return 512
    return max(8, _round_up(M, 8))


# ---------------------------------------------------------------------------
# Kernel 1: fused cv1 + cv2 (two 1x1 convs + folded BN + Hardswish) sharing
# one read of x.  Matmuls in bf16, f32 accumulation, bf16 outputs.
# ---------------------------------------------------------------------------
def _cv12_kernel(x_ref, w1_ref, s1_ref, b1_ref, w2_ref, s2_ref, b2_ref,
                 o1_ref, o2_ref):
    x = x_ref[...].astype(jnp.bfloat16)

    def head(w_ref, s_ref, b_ref, o_ref):
        y = jnp.dot(x, w_ref[...], preferred_element_type=jnp.float32)
        y = y * s_ref[...] + b_ref[...]          # folded BatchNorm2d
        y = _hardswish(y)
        o_ref[...] = y.astype(o_ref.dtype)

    head(w1_ref, s1_ref, b1_ref, o1_ref)
    head(w2_ref, s2_ref, b2_ref, o2_ref)


def fused_cv1_cv2(xf, w1, s1, b1, w2, s2, b2):
    """xf: (M, C1) f32. Weights are channel-padded bf16. Returns two (M, Cip) bf16."""
    M, c1 = xf.shape
    cip = w1.shape[1]
    TM = _row_tile(M)
    Mp = _round_up(M, TM)
    xp = xf if Mp == M else jnp.pad(xf, ((0, Mp - M), (0, 0)))

    full = lambda a: pl.BlockSpec(a.shape, lambda i, _n=a.ndim: (0,) * _n)
    row = lambda c: pl.BlockSpec((TM, c), lambda i: (i, 0))

    x1, x2 = pl.pallas_call(
        _cv12_kernel,
        grid=(Mp // TM,),
        in_specs=[row(c1), full(w1), full(s1), full(b1),
                  full(w2), full(s2), full(b2)],
        out_specs=(row(cip), row(cip)),
        out_shape=(jax.ShapeDtypeStruct((Mp, cip), jnp.bfloat16),
                   jax.ShapeDtypeStruct((Mp, cip), jnp.bfloat16)),
        compiler_params=pltpu.CompilerParams(dimension_semantics=("parallel",)),
    )(xp, w1, s1, b1, w2, s2, b2)
    if Mp != M:
        x1, x2 = x1[:M], x2[:M]
    return x1, x2


# ---------------------------------------------------------------------------
# Kernel 2: 3x3 conv (pad=1, stride=1) + folded BN + Hardswish.
# Spatially tiled over H with 1-row halos; zero-padded tile is built in a
# VMEM scratch (no HBM-side jnp.pad).  9 shifted bf16 matmuls on the MXU.
# TODO(synk): dx shifts could use pltpu.roll (XLU) instead of 9 sliced copies.
# ---------------------------------------------------------------------------
def _conv3x3_kernel(TH, W, Cin, Cout):
    def kernel(xc_ref, xu_ref, xd_ref, w_ref, s_ref, b_ref, o_ref, pad_ref):
        t = pl.program_id(1)
        nt = pl.num_programs(1)

        # Build the zero-padded (TH+2, W+2, Cin) input tile in VMEM.
        pad_ref[...] = jnp.zeros_like(pad_ref)
        pad_ref[1:TH + 1, 1:W + 1, :] = xc_ref[0]

        @pl.when(t > 0)
        def _():
            pad_ref[0:1, 1:W + 1, :] = xu_ref[0]       # halo row above

        @pl.when(t < nt - 1)
        def _():
            pad_ref[TH + 1:TH + 2, 1:W + 1, :] = xd_ref[0]   # halo row below

        xv = pad_ref[...]                               # (TH+2, W+2, Cin) bf16
        acc = jnp.zeros((TH * W, Cout), jnp.float32)
        for dy in range(3):
            for dx in range(3):
                patch = xv[dy:dy + TH, dx:dx + W, :].reshape(TH * W, Cin)
                acc = acc + jnp.dot(patch, w_ref[dy, dx],
                                    preferred_element_type=jnp.float32)
        y = acc * s_ref[...] + b_ref[...]               # folded BatchNorm2d
        y = _hardswish(y)
        o_ref[0] = y.reshape(TH, W, Cout).astype(o_ref.dtype)
    return kernel


def _pick_th(H):
    for th in (32, 16, 8):
        if H % th == 0 and H // th >= 2:
            return th
    return H


def conv3x3_bn_hswish(x, w, s, b):
    """x: (N,H,W,Cin) bf16, w: (3,3,Cin,Cout) bf16, s/b: (1,Cout) f32."""
    N, H, W, Cin = x.shape
    Cout = w.shape[-1]
    TH = _pick_th(H)
    nt = H // TH

    center_map = lambda n, t: (n, t, 0, 0)
    up_map = lambda n, t: (n, jnp.maximum(t * TH - 1, 0), 0, 0)
    down_map = lambda n, t: (n, jnp.minimum(t * TH + TH, H - 1), 0, 0)

    return pl.pallas_call(
        _conv3x3_kernel(TH, W, Cin, Cout),
        grid=(N, nt),
        in_specs=[
            pl.BlockSpec((1, TH, W, Cin), center_map),
            pl.BlockSpec((1, 1, W, Cin), up_map),
            pl.BlockSpec((1, 1, W, Cin), down_map),
            pl.BlockSpec((3, 3, Cin, Cout), lambda n, t: (0, 0, 0, 0)),
            pl.BlockSpec((1, Cout), lambda n, t: (0, 0)),
            pl.BlockSpec((1, Cout), lambda n, t: (0, 0)),
        ],
        out_specs=pl.BlockSpec((1, TH, W, Cout), center_map),
        out_shape=jax.ShapeDtypeStruct((N, H, W, Cout), jnp.bfloat16),
        scratch_shapes=[pltpu.VMEM((TH + 2, W + 2, Cin), jnp.bfloat16)],
        compiler_params=pltpu.CompilerParams(
            dimension_semantics=("parallel", "parallel")),
    )(x, x, x, w, s, b)


# ---------------------------------------------------------------------------
# Kernel 3: fused tail — cat([x1,x2,x3,x4]) + 1x1 conv + BN + Hardswish,
# expressed as 4 accumulated matmuls (no concat ever materialized).
# ---------------------------------------------------------------------------
def _tail_kernel(x1_ref, x2_ref, x3_ref, x4_ref, w_ref, s_ref, b_ref, o_ref):
    acc = jnp.dot(x1_ref[...], w_ref[0], preferred_element_type=jnp.float32)
    acc = acc + jnp.dot(x2_ref[...], w_ref[1], preferred_element_type=jnp.float32)
    acc = acc + jnp.dot(x3_ref[...], w_ref[2], preferred_element_type=jnp.float32)
    acc = acc + jnp.dot(x4_ref[...], w_ref[3], preferred_element_type=jnp.float32)
    y = acc * s_ref[...] + b_ref[...]                  # folded BatchNorm2d
    y = _hardswish(y)
    o_ref[...] = y.astype(o_ref.dtype)


def fused_tail(x1, x2, x3, x4, w, s, b):
    """x*: (M, Cip) bf16, w: (4, Cip, Coutp) bf16, s/b: (1, Coutp). -> (M, Coutp) f32."""
    M, cip = x1.shape
    c2p = w.shape[-1]
    TM = _row_tile(M)
    Mp = _round_up(M, TM)
    if Mp != M:
        pad = ((0, Mp - M), (0, 0))
        x1, x2, x3, x4 = [jnp.pad(v, pad) for v in (x1, x2, x3, x4)]

    row = pl.BlockSpec((TM, cip), lambda i: (i, 0))
    out = pl.pallas_call(
        _tail_kernel,
        grid=(Mp // TM,),
        in_specs=[row, row, row, row,
                  pl.BlockSpec(w.shape, lambda i: (0, 0, 0)),
                  pl.BlockSpec(s.shape, lambda i: (0, 0)),
                  pl.BlockSpec(b.shape, lambda i: (0, 0))],
        out_specs=pl.BlockSpec((TM, c2p), lambda i: (i, 0)),
        out_shape=jax.ShapeDtypeStruct((Mp, c2p), jnp.float32),
        compiler_params=pltpu.CompilerParams(dimension_semantics=("parallel",)),
    )(x1, x2, x3, x4, w, s, b)
    return out[:M] if Mp != M else out


# ---------------------------------------------------------------------------
# MCB_4a forward (Pallas kernels for all conv stages, glue in JAX).
# ---------------------------------------------------------------------------
def mcb4a_forward(x_nchw, PP):
    N, C1, H, W = x_nchw.shape
    x = jnp.transpose(x_nchw, (0, 2, 3, 1))            # NCHW -> NHWC
    M = N * H * W
    xf = x.reshape(M, C1)

    x1f, x2f = fused_cv1_cv2(xf, PP["w1"], PP["s1"], PP["b1"],
                             PP["w2"], PP["s2"], PP["b2"])
    cip = x1f.shape[1]

    x2 = x2f.reshape(N, H, W, cip)
    x3 = conv3x3_bn_hswish(x2, PP["w3"], PP["s3"], PP["b3"])
    x4 = conv3x3_bn_hswish(x3, PP["w4"], PP["s4"], PP["b4"])

    outp = fused_tail(x1f, x2f, x3.reshape(M, cip), x4.reshape(M, cip),
                      PP["wo"], PP["so"], PP["bo"])    # (M, c2p) f32
    c2 = PP["c2"]
    out = outp[:, :c2].reshape(N, H, W, c2)
    return jnp.transpose(out, (0, 3, 1, 2))            # NHWC -> NCHW


# ---------------------------------------------------------------------------
# Deterministic parameter construction (shapes from the PyTorch __init__).
# ---------------------------------------------------------------------------
def make_params(key, c1, c2, e=0.5, eps=1e-5):
    ci = int(c1 * e)
    keys = iter(jax.random.split(key, 32))

    def conv_w(cin, cout, k=1):
        if k == 1:
            return jax.random.normal(next(keys), (cin, cout), jnp.float32) * 0.3
        return jax.random.normal(next(keys), (k, k, cin, cout), jnp.float32) * 0.15

    def bn(c):
        gamma = 1.0 + 0.1 * jax.random.normal(next(keys), (c,), jnp.float32)
        beta = 0.1 * jax.random.normal(next(keys), (c,), jnp.float32)
        mean = 0.1 * jax.random.normal(next(keys), (c,), jnp.float32)
        var = 0.5 + jax.random.uniform(next(keys), (c,), jnp.float32)
        s = gamma / jnp.sqrt(var + eps)
        b = beta - mean * s
        return s, b

    P = {}
    P["cv1_w"] = conv_w(c1, ci); P["cv1_s"], P["cv1_b"] = bn(ci)
    P["cv2_w"] = conv_w(c1, ci); P["cv2_s"], P["cv2_b"] = bn(ci)
    P["cv3_w"] = conv_w(ci, ci, 3); P["cv3_s"], P["cv3_b"] = bn(ci)
    P["cv4_w"] = conv_w(ci, ci, 3); P["cv4_s"], P["cv4_b"] = bn(ci)
    P["out_w"] = conv_w(4 * ci, c2); P["out_s"], P["out_b"] = bn(c2)
    return P, ci


def prepare_params(P):
    """Pad channel dims to multiples of 128 lanes; weights -> bf16, BN -> f32."""
    c1, ci = P["cv1_w"].shape
    c2 = P["out_w"].shape[1]
    cip = _round_up(ci, LANE)
    c2p = _round_up(c2, LANE)

    def pad_w1(w, cout_p):
        return jnp.zeros((w.shape[0], cout_p), jnp.float32
                         ).at[:, :w.shape[1]].set(w).astype(jnp.bfloat16)

    def pad_w3(w):
        return jnp.zeros((3, 3, cip, cip), jnp.float32
                         ).at[:, :, :ci, :ci].set(w).astype(jnp.bfloat16)

    def pad_vec(v, cp):
        return jnp.zeros((1, cp), jnp.float32).at[0, :v.shape[0]].set(v)

    wo = jnp.zeros((4, cip, c2p), jnp.float32)
    for k in range(4):
        wo = wo.at[k, :ci, :c2].set(P["out_w"][k * ci:(k + 1) * ci, :])

    return dict(
        c2=c2,
        w1=pad_w1(P["cv1_w"], cip), s1=pad_vec(P["cv1_s"], cip), b1=pad_vec(P["cv1_b"], cip),
        w2=pad_w1(P["cv2_w"], cip), s2=pad_vec(P["cv2_s"], cip), b2=pad_vec(P["cv2_b"], cip),
        w3=pad_w3(P["cv3_w"]),      s3=pad_vec(P["cv3_s"], cip), b3=pad_vec(P["cv3_b"], cip),
        w4=pad_w3(P["cv4_w"]),      s4=pad_vec(P["cv4_s"], cip), b4=pad_vec(P["cv4_b"], cip),
        wo=wo.astype(jnp.bfloat16), so=pad_vec(P["out_s"], c2p), bo=pad_vec(P["out_b"], c2p),
    )


# ---------------------------------------------------------------------------
# Pure-JAX f32 reference (mirrors the PyTorch forward, eval-mode BN).
# ---------------------------------------------------------------------------
def reference_forward(x_nchw, P):
    x = jnp.transpose(x_nchw, (0, 2, 3, 1)).astype(jnp.float32)
    hsw = lambda v: v * jnp.clip(v + 3.0, 0.0, 6.0) / 6.0
    pw = lambda v, w, s, b: hsw(jnp.einsum("nhwc,cd->nhwd", v, w) * s + b)

    def c3(v, w, s, b):
        y = jax.lax.conv_general_dilated(
            v, w, (1, 1), "SAME", dimension_numbers=("NHWC", "HWIO", "NHWC"))
        return hsw(y * s + b)

    x1 = pw(x, P["cv1_w"], P["cv1_s"], P["cv1_b"])
    x2 = pw(x, P["cv2_w"], P["cv2_s"], P["cv2_b"])
    x3 = c3(x2, P["cv3_w"], P["cv3_s"], P["cv3_b"])
    x4 = c3(x3, P["cv4_w"], P["cv4_s"], P["cv4_b"])
    cat = jnp.concatenate([x1, x2, x3, x4], axis=-1)
    out = pw(cat, P["out_w"], P["out_s"], P["out_b"])
    return jnp.transpose(out, (0, 3, 1, 2))


if __name__ == "__main__":
    # Small deterministic example: N=2, in_dim=8, out_dim=16, H=W=16 (inter_dim=4)
    key = jax.random.PRNGKey(0)
    k_x, k_p = jax.random.split(key)
    N, C_IN, C_OUT, H, W = 2, 8, 16, 16, 16
    x = jax.random.normal(k_x, (N, C_IN, H, W), jnp.float32)

    P, ci = make_params(k_p, C_IN, C_OUT, e=0.5)
    PP = prepare_params(P)

    out = jax.block_until_ready(mcb4a_forward(x, PP))
    assert out.shape == (N, C_OUT, H, W), out.shape

    ref = jax.block_until_ready(reference_forward(x, P))
    np.testing.assert_allclose(np.asarray(out), np.asarray(ref),
                               rtol=5e-2, atol=5e-2)

    # TODO(synk): BatchNorm is eval-mode only (folded running stats); training-mode
    # batch statistics are not reproduced.
    print("KERNEL_OK")
</pallas_src>

<mosaic_0001>
module attributes {stable_mosaic.version = 11 : i64} {
  func.func @_cv12_kernel(%arg0: i32, %arg1: memref<512x8xf32, #tpu.memory_space<vmem>>, %arg2: memref<8x128xbf16, #tpu.memory_space<vmem>>, %arg3: memref<1x128xf32, #tpu.memory_space<vmem>>, %arg4: memref<1x128xf32, #tpu.memory_space<vmem>>, %arg5: memref<8x128xbf16, #tpu.memory_space<vmem>>, %arg6: memref<1x128xf32, #tpu.memory_space<vmem>>, %arg7: memref<1x128xf32, #tpu.memory_space<vmem>>, %arg8: memref<512x128xbf16, #tpu.memory_space<vmem>>, %arg9: memref<512x128xbf16, #tpu.memory_space<vmem>>) attributes {dimension_semantics = [#tpu.dimension_semantics<parallel>], iteration_bounds = array<i64: 1>, scalar_prefetch = 0 : i64, scratch_operands = 0 : i64, tpu.core_type = #tpu.core_type<tc>, window_params = [{transform_indices = @transform_0, window_bounds = array<i64: 512, 8>}, {pipeline_mode = #tpu.pipeline_mode<synchronous>, transform_indices = @transform_1, window_bounds = array<i64: 8, 128>}, {pipeline_mode = #tpu.pipeline_mode<synchronous>, transform_indices = @transform_2, window_bounds = array<i64: 1, 128>}, {pipeline_mode = #tpu.pipeline_mode<synchronous>, transform_indices = @transform_3, window_bounds = array<i64: 1, 128>}, {pipeline_mode = #tpu.pipeline_mode<synchronous>, transform_indices = @transform_4, window_bounds = array<i64: 8, 128>}, {pipeline_mode = #tpu.pipeline_mode<synchronous>, transform_indices = @transform_5, window_bounds = array<i64: 1, 128>}, {pipeline_mode = #tpu.pipeline_mode<synchronous>, transform_indices = @transform_6, window_bounds = array<i64: 1, 128>}, {transform_indices = @transform_7, window_bounds = array<i64: 512, 128>}, {transform_indices = @transform_8, window_bounds = array<i64: 512, 128>}]} {
    %c0 = arith.constant 0 : index
    %c0_0 = arith.constant 0 : index
    %0 = vector.load %arg1[%c0, %c0_0] : memref<512x8xf32, #tpu.memory_space<vmem>>, vector<512x8xf32>
    %1 = arith.truncf %0 : vector<512x8xf32> to vector<512x8xbf16>
    %c0_1 = arith.constant 0 : index
    %c0_2 = arith.constant 0 : index
    %2 = vector.load %arg2[%c0_1, %c0_2] : memref<8x128xbf16, #tpu.memory_space<vmem>>, vector<8x128xbf16>
    %cst = arith.constant dense<0.000000e+00> : vector<512x128xf32>
    %3 = tpu.matmul %1, %2, %cst {dimension_numbers = #tpu.dot_dimension_numbers<[1], [0], [0], [1], [0, 0, 1, 1], [], []>} : vector<512x8xbf16>, vector<8x128xbf16>, vector<512x128xf32> -> vector<512x128xf32>
    %c0_3 = arith.constant 0 : index
    %c0_4 = arith.constant 0 : index
    %4 = vector.load %arg3[%c0_3, %c0_4] : memref<1x128xf32, #tpu.memory_space<vmem>>, vector<1x128xf32>
    %5 = vector.broadcast %4 : vector<1x128xf32> to vector<512x128xf32>
    %6 = arith.mulf %3, %5 : vector<512x128xf32>
    %c0_5 = arith.constant 0 : index
    %c0_6 = arith.constant 0 : index
    %7 = vector.load %arg4[%c0_5, %c0_6] : memref<1x128xf32, #tpu.memory_space<vmem>>, vector<1x128xf32>
    %8 = vector.broadcast %7 : vector<1x128xf32> to vector<512x128xf32>
    %9 = arith.addf %6, %8 : vector<512x128xf32>
    %cst_7 = arith.constant 3.000000e+00 : f32
    %10 = vector.broadcast %cst_7 : f32 to vector<512x128xf32>
    %11 = arith.addf %9, %10 : vector<512x128xf32>
    %cst_8 = arith.constant 0.000000e+00 : f32
    %cst_9 = arith.constant 6.000000e+00 : f32
    %12 = vector.broadcast %cst_8 : f32 to vector<512x128xf32>
    %13 = arith.maximumf %12, %11 : vector<512x128xf32>
    %14 = vector.broadcast %cst_9 : f32 to vector<512x128xf32>
    %15 = arith.minimumf %14, %13 : vector<512x128xf32>
    %16 = arith.mulf %9, %15 : vector<512x128xf32>
    %cst_10 = arith.constant 0.166666672 : f32
    %17 = vector.broadcast %cst_10 : f32 to vector<512x128xf32>
    %18 = arith.mulf %16, %17 : vector<512x128xf32>
    %19 = arith.truncf %18 : vector<512x128xf32> to vector<512x128xbf16>
    %c0_11 = arith.constant 0 : index
    %c0_12 = arith.constant 0 : index
    %20 = vector.load %arg8[%c0_11, %c0_12] : memref<512x128xbf16, #tpu.memory_space<vmem>>, vector<512x128xbf16>
    tpu.vector_store %arg8[%c0_11, %c0_12], %19 {strides = array<i32>} : memref<512x128xbf16, #tpu.memory_space<vmem>>, vector<512x128xbf16>,
    %c0_13 = arith.constant 0 : index
    %c0_14 = arith.constant 0 : index
    %21 = vector.load %arg5[%c0_13, %c0_14] : memref<8x128xbf16, #tpu.memory_space<vmem>>, vector<8x128xbf16>
    %cst_15 = arith.constant dense<0.000000e+00> : vector<512x128xf32>
    %22 = tpu.matmul %1, %21, %cst_15 {dimension_numbers = #tpu.dot_dimension_numbers<[1], [0], [0], [1], [0, 0, 1, 1], [], []>} : vector<512x8xbf16>, vector<8x128xbf16>, vector<512x128xf32> -> vector<512x128xf32>
    %c0_16 = arith.constant 0 : index
    %c0_17 = arith.constant 0 : index
    %23 = vector.load %arg6[%c0_16, %c0_17] : memref<1x128xf32, #tpu.memory_space<vmem>>, vector<1x128xf32>
    %24 = vector.broadcast %23 : vector<1x128xf32> to vector<512x128xf32>
    %25 = arith.mulf %22, %24 : vector<512x128xf32>
    %c0_18 = arith.constant 0 : index
    %c0_19 = arith.constant 0 : index
    %26 = vector.load %arg7[%c0_18, %c0_19] : memref<1x128xf32, #tpu.memory_space<vmem>>, vector<1x128xf32>
    %27 = vector.broadcast %26 : vector<1x128xf32> to vector<512x128xf32>
    %28 = arith.addf %25, %27 : vector<512x128xf32>
    %cst_20 = arith.constant 3.000000e+00 : f32
    %29 = vector.broadcast %cst_20 : f32 to vector<512x128xf32>
    %30 = arith.addf %28, %29 : vector<512x128xf32>
    %cst_21 = arith.constant 0.000000e+00 : f32
    %cst_22 = arith.constant 6.000000e+00 : f32
    %31 = vector.broadcast %cst_21 : f32 to vector<512x128xf32>
    %32 = arith.maximumf %31, %30 : vector<512x128xf32>
    %33 = vector.broadcast %cst_22 : f32 to vector<512x128xf32>
    %34 = arith.minimumf %33, %32 : vector<512x128xf32>
    %35 = arith.mulf %28, %34 : vector<512x128xf32>
    %cst_23 = arith.constant 0.166666672 : f32
    %36 = vector.broadcast %cst_23 : f32 to vector<512x128xf32>
    %37 = arith.mulf %35, %36 : vector<512x128xf32>
    %38 = arith.truncf %37 : vector<512x128xf32> to vector<512x128xbf16>
    %c0_24 = arith.constant 0 : index
    %c0_25 = arith.constant 0 : index
    %39 = vector.load %arg9[%c0_24, %c0_25] : memref<512x128xbf16, #tpu.memory_space<vmem>>, vector<512x128xbf16>
    tpu.vector_store %arg9[%c0_24, %c0_25], %38 {strides = array<i32>} : memref<512x128xbf16, #tpu.memory_space<vmem>>, vector<512x128xbf16>,
    return
  }
  func.func @transform_0(%arg0: i32) -> (i32, i32) {
    %c0_i32 = arith.constant 0 : i32
    %c0_i32_0 = arith.constant 0 : i32
    return %arg0, %c0_i32 : i32, i32
  }
  func.func @transform_1(%arg0: i32) -> (i32, i32) {
    %c0_i32 = arith.constant 0 : i32
    %c0_i32_0 = arith.constant 0 : i32
    %c0_i32_1 = arith.constant 0 : i32
    return %c0_i32, %c0_i32_0 : i32, i32
  }
  func.func @transform_2(%arg0: i32) -> (i32, i32) {
    %c0_i32 = arith.constant 0 : i32
    %c0_i32_0 = arith.constant 0 : i32
    %c0_i32_1 = arith.constant 0 : i32
    return %c0_i32, %c0_i32_0 : i32, i32
  }
  func.func @transform_3(%arg0: i32) -> (i32, i32) {
    %c0_i32 = arith.constant 0 : i32
    %c0_i32_0 = arith.constant 0 : i32
    %c0_i32_1 = arith.constant 0 : i32
    return %c0_i32, %c0_i32_0 : i32, i32
  }
  func.func @transform_4(%arg0: i32) -> (i32, i32) {
    %c0_i32 = arith.constant 0 : i32
    %c0_i32_0 = arith.constant 0 : i32
    %c0_i32_1 = arith.constant 0 : i32
    return %c0_i32, %c0_i32_0 : i32, i32
  }
  func.func @transform_5(%arg0: i32) -> (i32, i32) {
    %c0_i32 = arith.constant 0 : i32
    %c0_i32_0 = arith.constant 0 : i32
    %c0_i32_1 = arith.constant 0 : i32
    return %c0_i32, %c0_i32_0 : i32, i32
  }
  func.func @transform_6(%arg0: i32) -> (i32, i32) {
    %c0_i32 = arith.constant 0 : i32
    %c0_i32_0 = arith.constant 0 : i32
    %c0_i32_1 = arith.constant 0 : i32
    return %c0_i32, %c0_i32_0 : i32, i32
  }
  func.func @transform_7(%arg0: i32) -> (i32, i32) {
    %c0_i32 = arith.constant 0 : i32
    %c0_i32_0 = arith.constant 0 : i32
    return %arg0, %c0_i32 : i32, i32
  }
  func.func @transform_8(%arg0: i32) -> (i32, i32) {
    %c0_i32 = arith.constant 0 : i32
    %c0_i32_0 = arith.constant 0 : i32
    return %arg0, %c0_i32 : i32, i32
  }
}

</mosaic_0001>

<llo_original>
// kernel: tpu_custom_call.1
$region0: #{tpu_custom_call.1}
  #allocation0 [shape = 'u32[]', space=smem, size = 0x4, offset = 0x4, fixed_abs, tag = 'smem constant byte address 0x4 - core index']
  #allocation1 [shape = 'u32[144,128]{1,0:T(1,128)}', space=vmem, size = 0x12000, scoped, tag = 'internal scratch']
  %s0 = inlined_call_operand.vmem [shape: f32[512,8], index: 0, kind: input, shape index: {}]
  %s1 = inlined_call_operand.vmem [shape: bf16[8,128], index: 1, kind: input, shape index: {}]
  %s2 = inlined_call_operand.vmem [shape: f32[1,128], index: 2, kind: input, shape index: {}]
  %s3 = inlined_call_operand.vmem [shape: f32[1,128], index: 3, kind: input, shape index: {}]
  %s4 = inlined_call_operand.vmem [shape: bf16[8,128], index: 4, kind: input, shape index: {}]
  %s5 = inlined_call_operand.vmem [shape: f32[1,128], index: 5, kind: input, shape index: {}]
  %s6 = inlined_call_operand.vmem [shape: f32[1,128], index: 6, kind: input, shape index: {}]
  %s7 = inlined_call_operand.hbm [shape: bf16[512,128], index: 7, kind: output, shape index: {0}]
  %s8 = inlined_call_operand.hbm [shape: bf16[512,128], index: 8, kind: output, shape index: {1}]
  %9 = xla_tuple %s7, %s8
  %s10 = sld [smem:[#allocation0]]
  $region46: #{tpu_custom_call.1} parent=0
    _
  %s12 = ssub.s32 1, %s10
  %s13 = scalar_select 0, %s12, %s10
  $region1: #{tpu_custom_call.1} parent=0
    #allocation2 [shape = 'u8[131072]{0}', space=vmem, size = 0x20000, scoped, tag = 'output window, operand 0, single buffered']
    #allocation3 [shape = 's32[1]{0}', space=sflag, size = 0x4, scoped, tag = 'scoped memory for tpu_custom_call.1']
    #allocation4 [shape = 'u8[131072]{0}', space=vmem, size = 0x20000, scoped, tag = 'output window, operand 1, single buffered']
    #allocation5 [shape = 's32[1]{0}', space=sflag, size = 0x4, scoped, tag = 'scoped memory for tpu_custom_call.1']
    %14 = vsyncpa [#allocation3], 0
    %15 = vsyncpa [#allocation5], 0
    // Predicated region
    $region2: #{tpu_custom_call.1} parent=1 // pred_check
      _
    $region3: #{tpu_custom_call.1} parent=1 // pred_check_branch
      %17 = sbr.rel (0) target = $region5
    $region4: #{tpu_custom_call.1} parent=1 // pred_region
      _
    $region5: #{tpu_custom_call.1} parent=1 // pred_fallthru
      _
    // Predicated region
    $region6: #{tpu_custom_call.1} parent=1 // pred_check
      _
    $region7: #{tpu_custom_call.1} parent=1 // pred_check_branch
      %19 = sbr.rel (0) target = $region9
    $region8: #{tpu_custom_call.1} parent=1 // pred_region
      _
    $region9: #{tpu_custom_call.1} parent=1 // pred_fallthru
      _
    // Predicated region
    $region10: #{tpu_custom_call.1} parent=1 // pred_check
      _
    $region11: #{tpu_custom_call.1} parent=1 // pred_check_branch
      %21 = sbr.rel (0) target = $region13
    $region12: #{tpu_custom_call.1} parent=1 // pred_region
      _
    $region13: #{tpu_custom_call.1} parent=1 // pred_fallthru
      _
    // Predicated region
    $region14: #{tpu_custom_call.1} parent=1 // pred_check
      _
    $region15: #{tpu_custom_call.1} parent=1 // pred_check_branch
      %23 = sbr.rel (0) target = $region17
    $region16: #{tpu_custom_call.1} parent=1 // pred_region
      _
    $region17: #{tpu_custom_call.1} parent=1 // pred_fallthru
      _
    // Predicated region
    $region18: #{tpu_custom_call.1} parent=1 // pred_check
      _
    $region19: #{tpu_custom_call.1} parent=1 // pred_check_branch
      %25 = sbr.rel (0) target = $region21
    $region20: #{tpu_custom_call.1} parent=1 // pred_region
      _
    $region21: #{tpu_custom_call.1} parent=1 // pred_fallthru
      _
    // Predicated region
    $region22: #{tpu_custom_call.1} parent=1 // pred_check
      _
    $region23: #{tpu_custom_call.1} parent=1 // pred_check_branch
      %27 = sbr.rel (0) target = $region25
    $region24: #{tpu_custom_call.1} parent=1 // pred_region
      _
    $region25: #{tpu_custom_call.1} parent=1 // pred_fallthru
      _
    // Predicated region
    $region26: #{tpu_custom_call.1} parent=1 // pred_check
      _
    $region27: #{tpu_custom_call.1} parent=1 // pred_check_branch
      %29 = sbr.rel (0) target = $region29
    $region28: #{tpu_custom_call.1} parent=1 // pred_region
      _
    $region29: #{tpu_custom_call.1} parent=1 // pred_fallthru
      _
    %v31 = vld [vmem:[%s0] sm:$0xff]
    %v32 = vld [vmem:[%s0 + $0x8] sm:$0xff]
    %v33 = vld [vmem:[%s0 + $0x10] sm:$0xff]
    %v34 = vld [vmem:[%s0 + $0x18] sm:$0xff]
    %v35 = vld [vmem:[%s0 + $0x20] sm:$0xff]
    %v36 = vld [vmem:[%s0 + $0x28] sm:$0xff]
    %v37 = vld [vmem:[%s0 + $0x30] sm:$0xff]
    %v38 = vld [vmem:[%s0 + $0x38] sm:$0xff]
    %v39 = vld [vmem:[%s0 + $0x40] sm:$0xff]
    %v40 = vld [vmem:[%s0 + $0x48] sm:$0xff]
    %v41 = vld [vmem:[%s0 + $0x50] sm:$0xff]
    %v42 = vld [vmem:[%s0 + $0x58] sm:$0xff]
    %v43 = vld [vmem:[%s0 + $0x60] sm:$0xff]
    %v44 = vld [vmem:[%s0 + $0x68] sm:$0xff]
    %v45 = vld [vmem:[%s0 + $0x70] sm:$0xff]
    %v46 = vld [vmem:[%s0 + $0x78] sm:$0xff]
    %v47 = vld [vmem:[%s0 + $0x80] sm:$0xff]
    %v48 = vld [vmem:[%s0 + $0x88] sm:$0xff]
    %v49 = vld [vmem:[%s0 + $0x90] sm:$0xff]
    %v50 = vld [vmem:[%s0 + $0x98] sm:$0xff]
    %v51 = vld [vmem:[%s0 + $0xa0] sm:$0xff]
    %v52 = vld [vmem:[%s0 + $0xa8] sm:$0xff]
    %v53 = vld [vmem:[%s0 + $0xb0] sm:$0xff]
    %v54 = vld [vmem:[%s0 + $0xb8] sm:$0xff]
    %v55 = vld [vmem:[%s0 + $0xc0] sm:$0xff]
    %v56 = vld [vmem:[%s0 + $0xc8] sm:$0xff]
    %v57 = vld [vmem:[%s0 + $0xd0] sm:$0xff]
    %v58 = vld [vmem:[%s0 + $0xd8] sm:$0xff]
    %v59 = vld [vmem:[%s0 + $0xe0] sm:$0xff]
    %v60 = vld [vmem:[%s0 + $0xe8] sm:$0xff]
    %v61 = vld [vmem:[%s0 + $0xf0] sm:$0xff]
    %v62 = vld [vmem:[%s0 + $0xf8] sm:$0xff]
    %v63 = vld [vmem:[%s0 + $0x100] sm:$0xff]
    %v64 = vld [vmem:[%s0 + $0x108] sm:$0xff]
    %v65 = vld [vmem:[%s0 + $0x110] sm:$0xff]
    %v66 = vld [vmem:[%s0 + $0x118] sm:$0xff]
    %v67 = vld [vmem:[%s0 + $0x120] sm:$0xff]
    %v68 = vld [vmem:[%s0 + $0x128] sm:$0xff]
    %v69 = vld [vmem:[%s0 + $0x130] sm:$0xff]
    %v70 = vld [vmem:[%s0 + $0x138] sm:$0xff]
    %v71 = vld [vmem:[%s0 + $0x140] sm:$0xff]
    %v72 = vld [vmem:[%s0 + $0x148] sm:$0xff]
    %v73 = vld [vmem:[%s0 + $0x150] sm:$0xff]
    %v74 = vld [vmem:[%s0 + $0x158] sm:$0xff]
    %v75 = vld [vmem:[%s0 + $0x160] sm:$0xff]
    %v76 = vld [vmem:[%s0 + $0x168] sm:$0xff]
    %v77 = vld [vmem:[%s0 + $0x170] sm:$0xff]
    %v78 = vld [vmem:[%s0 + $0x178] sm:$0xff]
    %v79 = vld [vmem:[%s0 + $0x180] sm:$0xff]
    %v80 = vld [vmem:[%s0 + $0x188] sm:$0xff]
    %v81 = vld [vmem:[%s0 + $0x190] sm:$0xff]
    %v82 = vld [vmem:[%s0 + $0x198] sm:$0xff]
    %v83 = vld [vmem:[%s0 + $0x1a0] sm:$0xff]
    %v84 = vld [vmem:[%s0 + $0x1a8] sm:$0xff]
    %v85 = vld [vmem:[%s0 + $0x1b0] sm:$0xff]
    %v86 = vld [vmem:[%s0 + $0x1b8] sm:$0xff]
    %v87 = vld [vmem:[%s0 + $0x1c0] sm:$0xff]
    %v88 = vld [vmem:[%s0 + $0x1c8] sm:$0xff]
    %v89 = vld [vmem:[%s0 + $0x1d0] sm:$0xff]
    %v90 = vld [vmem:[%s0 + $0x1d8] sm:$0xff]
    %v91 = vld [vmem:[%s0 + $0x1e0] sm:$0xff]
    %v92 = vld [vmem:[%s0 + $0x1e8] sm:$0xff]
    %v93 = vld [vmem:[%s0 + $0x1f0] sm:$0xff]
    %v94 = vld [vmem:[%s0 + $0x1f8] sm:$0xff]
    %v95 = vpack.c.bf16 %v32, %v31
    %v96 = vpack.c.bf16 %v34, %v33
    %v97 = vpack.c.bf16 %v36, %v35
    %v98 = vpack.c.bf16 %v38, %v37
    %v99 = vpack.c.bf16 %v40, %v39
    %v100 = vpack.c.bf16 %v42, %v41
    %v101 = vpack.c.bf16 %v44, %v43
    %v102 = vpack.c.bf16 %v46, %v45
    %v103 = vpack.c.bf16 %v48, %v47
    %v104 = vpack.c.bf16 %v50, %v49
    %v105 = vpack.c.bf16 %v52, %v51
    %v106 = vpack.c.bf16 %v54, %v53
    %v107 = vpack.c.bf16 %v56, %v55
    %v108 = vpack.c.bf16 %v58, %v57
    %v109 = vpack.c.bf16 %v60, %v59
    %v110 = vpack.c.bf16 %v62, %v61
    %v111 = vpack.c.bf16 %v64, %v63
    %v112 = vpack.c.bf16 %v66, %v65
    %v113 = vpack.c.bf16 %v68, %v67
    %v114 = vpack.c.bf16 %v70, %v69
    %v115 = vpack.c.bf16 %v72, %v71
    %v116 = vpack.c.bf16 %v74, %v73
    %v117 = vpack.c.bf16 %v76, %v75
    %v118 = vpack.c.bf16 %v78, %v77
    %v119 = vpack.c.bf16 %v80, %v79
    %v120 = vpack.c.bf16 %v82, %v81
    %v121 = vpack.c.bf16 %v84, %v83
    %v122 = vpack.c.bf16 %v86, %v85
    %v123 = vpack.c.bf16 %v88, %v87
    %v124 = vpack.c.bf16 %v90, %v89
    %v125 = vpack.c.bf16 %v92, %v91
    %v126 = vpack.c.bf16 %v94, %v93
    %v127 = vld [vmem:[%s1] sm:$0xf]
    %vm128 = vcmask 64512
    %v130 = vsel %vm128, %v95, 0
    %v133 = vsel %vm128, %v96, 0
    %v136 = vsel %vm128, %v97, 0
    %v139 = vsel %vm128, %v98, 0
    %v142 = vsel %vm128, %v99, 0
    %v145 = vsel %vm128, %v100, 0
    %v148 = vsel %vm128, %v101, 0
    %v151 = vsel %vm128, %v102, 0
    %v154 = vsel %vm128, %v103, 0
    %v157 = vsel %vm128, %v104, 0
    %v160 = vsel %vm128, %v105, 0
    %v163 = vsel %vm128, %v106, 0
    %v166 = vsel %vm128, %v107, 0
    %v169 = vsel %vm128, %v108, 0
    %v172 = vsel %vm128, %v109, 0
    %v175 = vsel %vm128, %v110, 0
    %v178 = vsel %vm128, %v111, 0
    %v181 = vsel %vm128, %v112, 0
    %v184 = vsel %vm128, %v113, 0
    %v187 = vsel %vm128, %v114, 0
    %v190 = vsel %vm128, %v115, 0
    %v193 = vsel %vm128, %v116, 0
    %v196 = vsel %vm128, %v117, 0
    %v199 = vsel %vm128, %v118, 0
    %v202 = vsel %vm128, %v119, 0
    %v205 = vsel %vm128, %v120, 0
    %v208 = vsel %vm128, %v121, 0
    %v211 = vsel %vm128, %v122, 0
    %v214 = vsel %vm128, %v123, 0
    %v217 = vsel %vm128, %v124, 0
    %v220 = vsel %vm128, %v125, 0
    %v223 = vsel %vm128, %v126, 0
    %vm225 = vcmask 1043456
    %v227 = vsel %vm225, %v127, 0
    %229 = vmatprep.subr.bf16.mxu0 0
    %230 = vmatpush1.bf16.msra.mxu0 %v227
    %231 = vmatprep.subr.bf16.mxu0 0
    %232 = vmatpush1.bf16.msra.mxu0 0
    %233 = vmatprep.subr.bf16.mxu0 0
    %234 = vmatpush1.bf16.msra.mxu0 0
    %235 = vmatprep.subr.bf16.mxu0 0
    %236 = vmatpush1.bf16.msra.mxu0 0
    %237 = vmatprep.subr.bf16.mxu0 0
    %238 = vmatpush1.bf16.msra.mxu0 0
    %239 = vmatprep.subr.bf16.mxu0 0
    %240 = vmatpush1.bf16.msra.mxu0 0
    %241 = vmatprep.subr.bf16.mxu0 0
    %242 = vmatpush1.bf16.msra.mxu0 0
    %243 = vmatprep.subr.bf16.mxu0 0
    %244 = vmatpush1.bf16.msra.mxu0 0
    %245 = vmatprep.subr.bf16.mxu0 0
    %246 = vmatpush1.bf16.msra.mxu0 0
    %247 = vmatprep.subr.bf16.mxu0 0
    %248 = vmatpush1.bf16.msra.mxu0 0
    %249 = vmatprep.subr.bf16.mxu0 0
    %250 = vmatpush1.bf16.msra.mxu0 0
    %251 = vmatprep.subr.bf16.mxu0 0
    %252 = vmatpush1.bf16.msra.mxu0 0
    %253 = vmatprep.subr.bf16.mxu0 0
    %254 = vmatpush1.bf16.msra.mxu0 0
    %255 = vmatprep.subr.bf16.mxu0 0
    %256 = vmatpush1.bf16.msra.mxu0 0
    %257 = vmatprep.subr.bf16.mxu0 0
    %258 = vmatpush1.bf16.msra.mxu0 0
    %259 = vmatprep.subr.bf16.mxu0 0
    %260 = vmatpush1.bf16.msra.mxu0 0
    %261 = vmatprep.mubr.bf16.mxu0 0
    %262 = vmatmul.mubr.bf16.gmra.mrb[0].mxu0 %v130
    %v263 = vpop.f32.mrb[0].mxu0
    %v264 = vadd.f32 0.0, %v263
    %v265 = vpop.f32.mrb[0].mxu0
    %v266 = vpop.f32.mrb[0].mxu0
    %v267 = vadd.f32 0.0, %v266
    %v268 = vpop.f32.mrb[0].mxu0
    %269 = vmatprep.mubr.bf16.mxu0 0
    %270 = vmatmul.mubr.bf16.gmra.mrb[0].mxu0 %v133
    %v271 = vpop.f32.mrb[0].mxu0
    %v272 = vadd.f32 0.0, %v271
    %v273 = vpop.f32.mrb[0].mxu0
    %v274 = vpop.f32.mrb[0].mxu0
    %v275 = vadd.f32 0.0, %v274
    %v276 = vpop.f32.mrb[0].mxu0
    %277 = vmatprep.mubr.bf16.mxu0 0
    %278 = vmatmul.mubr.bf16.gmra.mrb[0].mxu0 %v136
    %v279 = vpop.f32.mrb[0].mxu0
    %v280 = vadd.f32 0.0, %v279
    %v281 = vpop.f32.mrb[0].mxu0
    %v282 = vpop.f32.mrb[0].mxu0
    %v283 = vadd.f32 0.0, %v282
    %v284 = vpop.f32.mrb[0].mxu0
    %285 = vmatprep.mubr.bf16.mxu0 0
    %286 = vmatmul.mubr.bf16.gmra.mrb[0].mxu0 %v139
    %v287 = vpop.f32.mrb[0].mxu0
    %v288 = vadd.f32 0.0, %v287
    %v289 = vpop.f32.mrb[0].mxu0
    %v290 = vpop.f32.mrb[0].mxu0
    %v291 = vadd.f32 0.0, %v290
    %v292 = vpop.f32.mrb[0].mxu0
    %293 = vmatprep.mubr.bf16.mxu0 0
    %294 = vmatmul.mubr.bf16.gmra.mrb[0].mxu0 %v142
    %v295 = vpop.f32.mrb[0].mxu0
    %v296 = vadd.f32 0.0, %v295
    %v297 = vpop.f32.mrb[0].mxu0
    %v298 = vpop.f32.mrb[0].mxu0
    %v299 = vadd.f32 0.0, %v298
    %v300 = vpop.f32.mrb[0].mxu0
    %301 = vmatprep.mubr.bf16.mxu0 0
    %302 = vmatmul.mubr.bf16.gmra.mrb[0].mxu0 %v145
    %v303 = vpop.f32.mrb[0].mxu0
    %v304 = vadd.f32 0.0, %v303
    %v305 = vpop.f32.mrb[0].mxu0
    %v306 = vpop.f32.mrb[0].mxu0
    %v307 = vadd.f32 0.0, %v306
    %v308 = vpop.f32.mrb[0].mxu0
    %309 = vmatprep.mubr.bf16.mxu0 0
    %310 = vmatmul.mubr.bf16.gmra.mrb[0].mxu0 %v148
    %v311 = vpop.f32.mrb[0].mxu0
    %v312 = vadd.f32 0.0, %v311
    %v313 = vpop.f32.mrb[0].mxu0
    %v314 = vpop.f32.mrb[0].mxu0
    %v315 = vadd.f32 0.0, %v314
    %v316 = vpop.f32.mrb[0].mxu0
    %317 = vmatprep.mubr.bf16.mxu0 0
    %318 = vmatmul.mubr.bf16.gmra.mrb[0].mxu0 %v151
    %v319 = vpop.f32.mrb[0].mxu0
    %v320 = vadd.f32 0.0, %v319
    %v321 = vpop.f32.mrb[0].mxu0
    %v322 = vpop.f32.mrb[0].mxu0
    %v323 = vadd.f32 0.0, %v322
    %v324 = vpop.f32.mrb[0].mxu0
    %325 = vmatprep.mubr.bf16.mxu0 0
    %326 = vmatmul.mubr.bf16.gmra.mrb[0].mxu0 %v154
    %v327 = vpop.f32.mrb[0].mxu0
    %v328 = vadd.f32 0.0, %v327
    %v329 = vpop.f32.mrb[0].mxu0
    %v330 = vpop.f32.mrb[0].mxu0
    %v331 = vadd.f32 0.0, %v330
    %v332 = vpop.f32.mrb[0].mxu0
    %333 = vmatprep.mubr.bf16.mxu0 0
    %334 = vmatmul.mubr.bf16.gmra.mrb[0].mxu0 %v157
    %v335 = vpop.f32.mrb[0].mxu0
    %v336 = vadd.f32 0.0, %v335
    %v337 = vpop.f32.mrb[0].mxu0
    %v338 = vpop.f32.mrb[0].mxu0
    %v339 = vadd.f32 0.0, %v338
    %v340 = vpop.f32.mrb[0].mxu0
    %341 = vmatprep.mubr.bf16.mxu0 0
    %342 = vmatmul.mubr.bf16.gmra.mrb[0].mxu0 %v160
    %v343 = vpop.f32.mrb[0].mxu0
    %v344 = vadd.f32 0.0, %v343
    %v345 = vpop.f32.mrb[0].mxu0
    %v346 = vpop.f32.mrb[0].mxu0
    %v347 = vadd.f32 0.0, %v346
    %v348 = vpop.f32.mrb[0].mxu0
    %349 = vmatprep.mubr.bf16.mxu0 0
    %350 = vmatmul.mubr.bf16.gmra.mrb[0].mxu0 %v163
    %v351 = vpop.f32.mrb[0].mxu0
    %v352 = vadd.f32 0.0, %v351
    %v353 = vpop.f32.mrb[0].mxu0
    %v354 = vpop.f32.mrb[0].mxu0
    %v355 = vadd.f32 0.0, %v354
    %v356 = vpop.f32.mrb[0].mxu0
    %357 = vmatprep.mubr.bf16.mxu0 0
    %358 = vmatmul.mubr.bf16.gmra.mrb[0].mxu0 %v166
    %v359 = vpop.f32.mrb[0].mxu0
    %v360 = vadd.f32 0.0, %v359
    %v361 = vpop.f32.mrb[0].mxu0
    %v362 = vpop.f32.mrb[0].mxu0
    %v363 = vadd.f32 0.0, %v362
    %v364 = vpop.f32.mrb[0].mxu0
    %365 = vmatprep.mubr.bf16.mxu0 0
    %366 = vmatmul.mubr.bf16.gmra.mrb[0].mxu0 %v169
    %v367 = vpop.f32.mrb[0].mxu0
    %v368 = vadd.f32 0.0, %v367
    %v369 = vpop.f32.mrb[0].mxu0
    %v370 = vpop.f32.mrb[0].mxu0
    %v371 = vadd.f32 0.0, %v370
    %v372 = vpop.f32.mrb[0].mxu0
    %373 = vmatprep.mubr.bf16.mxu0 0
    %374 = vmatmul.mubr.bf16.gmra.mrb[0].mxu0 %v172
    %v375 = vpop.f32.mrb[0].mxu0
    %v376 = vadd.f32 0.0, %v375
    %v377 = vpop.f32.mrb[0].mxu0
    %v378 = vpop.f32.mrb[0].mxu0
    %v379 = vadd.f32 0.0, %v378
    %v380 = vpop.f32.mrb[0].mxu0
    %381 = vmatprep.mubr.bf16.mxu0 0
    %382 = vmatmul.mubr.bf16.gmra.mrb[0].mxu0 %v175
    %v383 = vpop.f32.mrb[0].mxu0
    %v384 = vadd.f32 0.0, %v383
    %v385 = vpop.f32.mrb[0].mxu0
    %v386 = vpop.f32.mrb[0].mxu0
    %v387 = vadd.f32 0.0, %v386
    %v388 = vpop.f32.mrb[0].mxu0
    %389 = vmatprep.mubr.bf16.mxu0 0
    %390 = vmatmul.mubr.bf16.gmra.mrb[0].mxu0 %v178
    %v391 = vpop.f32.mrb[0].mxu0
    %v392 = vadd.f32 0.0, %v391
    %v393 = vpop.f32.mrb[0].mxu0
    %v394 = vpop.f32.mrb[0].mxu0
    %v395 = vadd.f32 0.0, %v394
    %v396 = vpop.f32.mrb[0].mxu0
    %397 = vmatprep.mubr.bf16.mxu0 0
    %398 = vmatmul.mubr.bf16.gmra.mrb[0].mxu0 %v181
    %v399 = vpop.f32.mrb[0].mxu0
    %v400 = vadd.f32 0.0, %v399
    %v401 = vpop.f32.mrb[0].mxu0
    %v402 = vpop.f32.mrb[0].mxu0
    %v403 = vadd.f32 0.0, %v402
    %v404 = vpop.f32.mrb[0].mxu0
    %405 = vmatprep.mubr.bf16.mxu0 0
    %406 = vmatmul.mubr.bf16.gmra.mrb[0].mxu0 %v184
    %v407 = vpop.f32.mrb[0].mxu0
    %v408 = vadd.f32 0.0, %v407
    %v409 = vpop.f32.mrb[0].mxu0
    %v410 = vpop.f32.mrb[0].mxu0
    %v411 = vadd.f32 0.0, %v410
    %v412 = vpop.f32.mrb[0].mxu0
    %413 = vmatprep.mubr.bf16.mxu0 0
    %414 = vmatmul.mubr.bf16.gmra.mrb[0].mxu0 %v187
    %v415 = vpop.f32.mrb[0].mxu0
    %v416 = vadd.f32 0.0, %v415
    %v417 = vpop.f32.mrb[0].mxu0
    %v418 = vpop.f32.mrb[0].mxu0
    %v419 = vadd.f32 0.0, %v418
    %v420 = vpop.f32.mrb[0].mxu0
    %421 = vmatprep.mubr.bf16.mxu0 0
    %422 = vmatmul.mubr.bf16.gmra.mrb[0].mxu0 %v190
    %v423 = vpop.f32.mrb[0].mxu0
    %v424 = vadd.f32 0.0, %v423
    %v425 = vpop.f32.mrb[0].mxu0
    %v426 = vpop.f32.mrb[0].mxu0
    %v427 = vadd.f32 0.0, %v426
    %v428 = vpop.f32.mrb[0].mxu0
    %429 = vmatprep.mubr.bf16.mxu0 0
    %430 = vmatmul.mubr.bf16.gmra.mrb[0].mxu0 %v193
    %v431 = vpop.f32.mrb[0].mxu0
    %v432 = vadd.f32 0.0, %v431
    %v433 = vpop.f32.mrb[0].mxu0
    %v434 = vpop.f32.mrb[0].mxu0
    %v435 = vadd.f32 0.0, %v434
    %v436 = vpop.f32.mrb[0].mxu0
    %437 = vmatprep.mubr.bf16.mxu0 0
    %438 = vmatmul.mubr.bf16.gmra.mrb[0].mxu0 %v196
    %v439 = vpop.f32.mrb[0].mxu0
    %v440 = vadd.f32 0.0, %v439
    %v441 = vpop.f32.mrb[0].mxu0
    %v442 = vpop.f32.mrb[0].mxu0
    %v443 = vadd.f32 0.0, %v442
    %v444 = vpop.f32.mrb[0].mxu0
    %445 = vmatprep.mubr.bf16.mxu0 0
    %446 = vmatmul.mubr.bf16.gmra.mrb[0].mxu0 %v199
    %v447 = vpop.f32.mrb[0].mxu0
    %v448 = vadd.f32 0.0, %v447
    %v449 = vpop.f32.mrb[0].mxu0
    %v450 = vpop.f32.mrb[0].mxu0
    %v451 = vadd.f32 0.0, %v450
    %v452 = vpop.f32.mrb[0].mxu0
    %453 = vmatprep.mubr.bf16.mxu0 0
    %454 = vmatmul.mubr.bf16.gmra.mrb[0].mxu0 %v202
    %v455 = vpop.f32.mrb[0].mxu0
    %v456 = vadd.f32 0.0, %v455
    %v457 = vpop.f32.mrb[0].mxu0
    %v458 = vpop.f32.mrb[0].mxu0
    %v459 = vadd.f32 0.0, %v458
    %v460 = vpop.f32.mrb[0].mxu0
    %461 = vmatprep.mubr.bf16.mxu0 0
    %462 = vmatmul.mubr.bf16.gmra.mrb[0].mxu0 %v205
    %v463 = vpop.f32.mrb[0].mxu0
    %v464 = vadd.f32 0.0, %v463
    %v465 = vpop.f32.mrb[0].mxu0
    %v466 = vpop.f32.mrb[0].mxu0
    %v467 = vadd.f32 0.0, %v466
    %v468 = vpop.f32.mrb[0].mxu0
    %469 = vmatprep.mubr.bf16.mxu0 0
    %470 = vmatmul.mubr.bf16.gmra.mrb[0].mxu0 %v208
    %v471 = vpop.f32.mrb[0].mxu0
    %v472 = vadd.f32 0.0, %v471
    %v473 = vpop.f32.mrb[0].mxu0
    %v474 = vpop.f32.mrb[0].mxu0
    %v475 = vadd.f32 0.0, %v474
    %v476 = vpop.f32.mrb[0].mxu0
    %477 = vmatprep.mubr.bf16.mxu0 0
    %478 = vmatmul.mubr.bf16.gmra.mrb[0].mxu0 %v211
    %v479 = vpop.f32.mrb[0].mxu0
    %v480 = vadd.f32 0.0, %v479
    %v481 = vpop.f32.mrb[0].mxu0
    %v482 = vpop.f32.mrb[0].mxu0
    %v483 = vadd.f32 0.0, %v482
    %v484 = vpop.f32.mrb[0].mxu0
    %485 = vmatprep.mubr.bf16.mxu0 0
    %486 = vmatmul.mubr.bf16.gmra.mrb[0].mxu0 %v214
    %v487 = vpop.f32.mrb[0].mxu0
    %v488 = vadd.f32 0.0, %v487
    %v489 = vpop.f32.mrb[0].mxu0
    %v490 = vpop.f32.mrb[0].mxu0
    %v491 = vadd.f32 0.0, %v490
    %v492 = vpop.f32.mrb[0].mxu0
    %493 = vmatprep.mubr.bf16.mxu0 0
    %494 = vmatmul.mubr.bf16.gmra.mrb[0].mxu0 %v217
    %v495 = vpop.f32.mrb[0].mxu0
    %v496 = vadd.f32 0.0, %v495
    %v497 = vpop.f32.mrb[0].mxu0
    %v498 = vpop.f32.mrb[0].mxu0
    %v499 = vadd.f32 0.0, %v498
    %v500 = vpop.f32.mrb[0].mxu0
    %501 = vmatprep.mubr.bf16.mxu0 0
    %502 = vmatmul.mubr.bf16.gmra.mrb[0].mxu0 %v220
    %v503 = vpop.f32.mrb[0].mxu0
    %v504 = vadd.f32 0.0, %v503
    %v505 = vpop.f32.mrb[0].mxu0
    %v506 = vpop.f32.mrb[0].mxu0
    %v507 = vadd.f32 0.0, %v506
    %v508 = vpop.f32.mrb[0].mxu0
    %509 = vmatprep.mubr.bf16.mxu0 0
    %510 = vmatmul.mubr.bf16.gmra.mrb[0].mxu0 %v223
    %v511 = vpop.f32.mrb[0].mxu0
    %v512 = vadd.f32 0.0, %v511
    %v513 = vpop.f32.mrb[0].mxu0
    %v514 = vpop.f32.mrb[0].mxu0
    %v515 = vadd.f32 0.0, %v514
    %v516 = vpop.f32.mrb[0].mxu0
    %517 = vdwg.mxu0
    %v518 = vld [vmem:[%s2] sm:$0x1]
    %v520 = vlaneseq
    %v521 = vshrl.u32 %v520, 7
    %v522 = vsub.s32 0, %v521
    %v523 = vrot.slane %v518, %v522
    %v525 = vmul.f32 %v264, %v523
    %v526 = vmul.f32 %v267, %v523
    %v527 = vmul.f32 %v272, %v523
    %v528 = vmul.f32 %v275, %v523
    %v529 = vmul.f32 %v280, %v523
    %v530 = vmul.f32 %v283, %v523
    %v531 = vmul.f32 %v288, %v523
    %v532 = vmul.f32 %v291, %v523
    %v533 = vmul.f32 %v296, %v523
    %v534 = vmul.f32 %v299, %v523
    %v535 = vmul.f32 %v304, %v523
    %v536 = vmul.f32 %v307, %v523
    %v537 = vmul.f32 %v312, %v523
    %v538 = vmul.f32 %v315, %v523
    %v539 = vmul.f32 %v320, %v523
    %v540 = vmul.f32 %v323, %v523
    %v541 = vmul.f32 %v328, %v523
    %v542 = vmul.f32 %v331, %v523
    %v543 = vmul.f32 %v336, %v523
    %v544 = vmul.f32 %v339, %v523
    %v545 = vmul.f32 %v344, %v523
    %v546 = vmul.f32 %v347, %v523
    %v547 = vmul.f32 %v352, %v523
    %v548 = vmul.f32 %v355, %v523
    %v549 = vmul.f32 %v360, %v523
    %v550 = vmul.f32 %v363, %v523
    %v551 = vmul.f32 %v368, %v523
    %v552 = vmul.f32 %v371, %v523
    %v553 = vmul.f32 %v376, %v523
    %v554 = vmul.f32 %v379, %v523
    %v555 = vmul.f32 %v384, %v523
    %v556 = vmul.f32 %v387, %v523
    %v557 = vmul.f32 %v392, %v523
    %v558 = vmul.f32 %v395, %v523
    %v559 = vmul.f32 %v400, %v523
    %v560 = vmul.f32 %v403, %v523
    %v561 = vmul.f32 %v408, %v523
    %v562 = vmul.f32 %v411, %v523
    %v563 = vmul.f32 %v416, %v523
    %v564 = vmul.f32 %v419, %v523
    %v565 = vmul.f32 %v424, %v523
    %v566 = vmul.f32 %v427, %v523
    %v567 = vmul.f32 %v432, %v523
    %v568 = vmul.f32 %v435, %v523
    %v569 = vmul.f32 %v440, %v523
    %v570 = vmul.f32 %v443, %v523
    %v571 = vmul.f32 %v448, %v523
    %v572 = vmul.f32 %v451, %v523
    %v573 = vmul.f32 %v456, %v523
    %v574 = vmul.f32 %v459, %v523
    %v575 = vmul.f32 %v464, %v523
    %v576 = vmul.f32 %v467, %v523
    %v577 = vmul.f32 %v472, %v523
    %v578 = vmul.f32 %v475, %v523
    %v579 = vmul.f32 %v480, %v523
    %v580 = vmul.f32 %v483, %v523
    %v581 = vmul.f32 %v488, %v523
    %v582 = vmul.f32 %v491, %v523
    %v583 = vmul.f32 %v496, %v523
    %v584 = vmul.f32 %v499, %v523
    %v585 = vmul.f32 %v504, %v523
    %v586 = vmul.f32 %v507, %v523
    %v587 = vmul.f32 %v512, %v523
    %v588 = vmul.f32 %v515, %v523
    %v589 = vld [vmem:[%s3] sm:$0x1]
    %v591 = vlaneseq
    %v592 = vshrl.u32 %v591, 7
    %v593 = vsub.s32 0, %v592
    %v594 = vrot.slane %v589, %v593
    %v596 = vadd.f32 %v525, %v594
    %v597 = vadd.f32 %v526, %v594
    %v598 = vadd.f32 %v527, %v594
    %v599 = vadd.f32 %v528, %v594
    %v600 = vadd.f32 %v529, %v594
    %v601 = vadd.f32 %v530, %v594
    %v602 = vadd.f32 %v531, %v594
    %v603 = vadd.f32 %v532, %v594
    %v604 = vadd.f32 %v533, %v594
    %v605 = vadd.f32 %v534, %v594
    %v606 = vadd.f32 %v535, %v594
    %v607 = vadd.f32 %v536, %v594
    %v608 = vadd.f32 %v537, %v594
    %v609 = vadd.f32 %v538, %v594
    %v610 = vadd.f32 %v539, %v594
    %v611 = vadd.f32 %v540, %v594
    %v612 = vadd.f32 %v541, %v594
    %v613 = vadd.f32 %v542, %v594
    %v614 = vadd.f32 %v543, %v594
    %v615 = vadd.f32 %v544, %v594
    %v616 = vadd.f32 %v545, %v594
    %v617 = vadd.f32 %v546, %v594
    %v618 = vadd.f32 %v547, %v594
    %v619 = vadd.f32 %v548, %v594
    %v620 = vadd.f32 %v549, %v594
    %v621 = vadd.f32 %v550, %v594
    %v622 = vadd.f32 %v551, %v594
    %v623 = vadd.f32 %v552, %v594
    %v624 = vadd.f32 %v553, %v594
    %v625 = vadd.f32 %v554, %v594
    %v626 = vadd.f32 %v555, %v594
    %v627 = vadd.f32 %v556, %v594
    %v628 = vadd.f32 %v557, %v594
    %v629 = vadd.f32 %v558, %v594
    %v630 = vadd.f32 %v559, %v594
    %v631 = vadd.f32 %v560, %v594
    %v632 = vadd.f32 %v561, %v594
    %v633 = vadd.f32 %v562, %v594
    %v634 = vadd.f32 %v563, %v594
    %v635 = vadd.f32 %v564, %v594
    %v636 = vadd.f32 %v565, %v594
    %v637 = vadd.f32 %v566, %v594
    %v638 = vadd.f32 %v567, %v594
    %v639 = vadd.f32 %v568, %v594
    %v640 = vadd.f32 %v569, %v594
    %v641 = vadd.f32 %v570, %v594
    %v642 = vadd.f32 %v571, %v594
    %v643 = vadd.f32 %v572, %v594
    %v644 = vadd.f32 %v573, %v594
    %v645 = vadd.f32 %v574, %v594
    %v646 = vadd.f32 %v575, %v594
    %v647 = vadd.f32 %v576, %v594
    %v648 = vadd.f32 %v577, %v594
    %v649 = vadd.f32 %v578, %v594
    %v650 = vadd.f32 %v579, %v594
    %v651 = vadd.f32 %v580, %v594
    %v652 = vadd.f32 %v581, %v594
    %v653 = vadd.f32 %v582, %v594
    %v654 = vadd.f32 %v583, %v594
    %v655 = vadd.f32 %v584, %v594
    %v656 = vadd.f32 %v585, %v594
    %v657 = vadd.f32 %v586, %v594
    %v658 = vadd.f32 %v587, %v594
    %v659 = vadd.f32 %v588, %v594
    %v660 = vadd.f32 %v596, 3.0
    %v661 = vadd.f32 %v597, 3.0
    %v662 = vadd.f32 %v598, 3.0
    %v663 = vadd.f32 %v599, 3.0
    %v664 = vadd.f32 %v600, 3.0
    %v665 = vadd.f32 %v601, 3.0
    %v666 = vadd.f32 %v602, 3.0
    %v667 = vadd.f32 %v603, 3.0
    %v668 = vadd.f32 %v604, 3.0
    %v669 = vadd.f32 %v605, 3.0
    %v670 = vadd.f32 %v606, 3.0
    %v671 = vadd.f32 %v607, 3.0
    %v672 = vadd.f32 %v608, 3.0
    %v673 = vadd.f32 %v609, 3.0
    %v674 = vadd.f32 %v610, 3.0
    %v675 = vadd.f32 %v611, 3.0
    %v676 = vadd.f32 %v612, 3.0
    %v677 = vadd.f32 %v613, 3.0
    %v678 = vadd.f32 %v614, 3.0
    %v679 = vadd.f32 %v615, 3.0
    %v680 = vadd.f32 %v616, 3.0
    %v681 = vadd.f32 %v617, 3.0
    %v682 = vadd.f32 %v618, 3.0
    %v683 = vadd.f32 %v619, 3.0
    %v684 = vadd.f32 %v620, 3.0
    %v685 = vadd.f32 %v621, 3.0
    %v686 = vadd.f32 %v622, 3.0
    %v687 = vadd.f32 %v623, 3.0
    %v688 = vadd.f32 %v624, 3.0
    %v689 = vadd.f32 %v625, 3.0
    %v690 = vadd.f32 %v626, 3.0
    %v691 = vadd.f32 %v627, 3.0
    %v692 = vadd.f32 %v628, 3.0
    %v693 = vadd.f32 %v629, 3.0
    %v694 = vadd.f32 %v630, 3.0
    %v695 = vadd.f32 %v631, 3.0
    %v696 = vadd.f32 %v632, 3.0
    %v697 = vadd.f32 %v633, 3.0
    %v698 = vadd.f32 %v634, 3.0
    %v699 = vadd.f32 %v635, 3.0
    %v700 = vadd.f32 %v636, 3.0
    %v701 = vadd.f32 %v637, 3.0
    %v702 = vadd.f32 %v638, 3.0
    %v703 = vadd.f32 %v639, 3.0
    %v704 = vadd.f32 %v640, 3.0
    %v705 = vadd.f32 %v641, 3.0
    %v706 = vadd.f32 %v642, 3.0
    %v707 = vadd.f32 %v643, 3.0
    %v708 = vadd.f32 %v644, 3.0
    %v709 = vadd.f32 %v645, 3.0
    %v710 = vadd.f32 %v646, 3.0
    %v711 = vadd.f32 %v647, 3.0
    %v712 = vadd.f32 %v648, 3.0
    %v713 = vadd.f32 %v649, 3.0
    %v714 = vadd.f32 %v650, 3.0
    %v715 = vadd.f32 %v651, 3.0
    %v716 = vadd.f32 %v652, 3.0
    %v717 = vadd.f32 %v653, 3.0
    %v718 = vadd.f32 %v654, 3.0
    %v719 = vadd.f32 %v655, 3.0
    %v720 = vadd.f32 %v656, 3.0
    %v721 = vadd.f32 %v657, 3.0
    %v722 = vadd.f32 %v658, 3.0
    %v723 = vadd.f32 %v659, 3.0
    %v724 = vmax.f32 %v660, 0.0
    %v725 = vmax.f32 %v661, 0.0
    %v726 = vmax.f32 %v662, 0.0
    %v727 = vmax.f32 %v663, 0.0
    %v728 = vmax.f32 %v664, 0.0
    %v729 = vmax.f32 %v665, 0.0
    %v730 = vmax.f32 %v666, 0.0
    %v731 = vmax.f32 %v667, 0.0
    %v732 = vmax.f32 %v668, 0.0
    %v733 = vmax.f32 %v669, 0.0
    %v734 = vmax.f32 %v670, 0.0
    %v735 = vmax.f32 %v671, 0.0
    %v736 = vmax.f32 %v672, 0.0
    %v737 = vmax.f32 %v673, 0.0
    %v738 = vmax.f32 %v674, 0.0
    %v739 = vmax.f32 %v675, 0.0
    %v740 = vmax.f32 %v676, 0.0
    %v741 = vmax.f32 %v677, 0.0
    %v742 = vmax.f32 %v678, 0.0
    %v743 = vmax.f32 %v679, 0.0
    %v744 = vmax.f32 %v680, 0.0
    %v745 = vmax.f32 %v681, 0.0
    %v746 = vmax.f32 %v682, 0.0
    %v747 = vmax.f32 %v683, 0.0
    %v748 = vmax.f32 %v684, 0.0
    %v749 = vmax.f32 %v685, 0.0
    %v750 = vmax.f32 %v686, 0.0
    %v751 = vmax.f32 %v687, 0.0
    %v752 = vmax.f32 %v688, 0.0
    %v753 = vmax.f32 %v689, 0.0
    %v754 = vmax.f32 %v690, 0.0
    %v755 = vmax.f32 %v691, 0.0
    %v756 = vmax.f32 %v692, 0.0
    %v757 = vmax.f32 %v693, 0.0
    %v758 = vmax.f32 %v694, 0.0
    %v759 = vmax.f32 %v695, 0.0
    %v760 = vmax.f32 %v696, 0.0
    %v761 = vmax.f32 %v697, 0.0
    %v762 = vmax.f32 %v698, 0.0
    %v763 = vmax.f32 %v699, 0.0
    %v764 = vmax.f32 %v700, 0.0
    %v765 = vmax.f32 %v701, 0.0
    %v766 = vmax.f32 %v702, 0.0
    %v767 = vmax.f32 %v703, 0.0
    %v768 = vmax.f32 %v704, 0.0
    %v769 = vmax.f32 %v705, 0.0
    %v770 = vmax.f32 %v706, 0.0
    %v771 = vmax.f32 %v707, 0.0
    %v772 = vmax.f32 %v708, 0.0
    %v773 = vmax.f32 %v709, 0.0
    %v774 = vmax.f32 %v710, 0.0
    %v775 = vmax.f32 %v711, 0.0
    %v776 = vmax.f32 %v712, 0.0
    %v777 = vmax.f32 %v713, 0.0
    %v778 = vmax.f32 %v714, 0.0
    %v779 = vmax.f32 %v715, 0.0
    %v780 = vmax.f32 %v716, 0.0
    %v781 = vmax.f32 %v717, 0.0
    %v782 = vmax.f32 %v718, 0.0
    %v783 = vmax.f32 %v719, 0.0
    %v784 = vmax.f32 %v720, 0.0
    %v785 = vmax.f32 %v721, 0.0
    %v786 = vmax.f32 %v722, 0.0
    %v787 = vmax.f32 %v723, 0.0
    %v788 = vmin.f32 %v724, 6.0
    %v789 = vmin.f32 %v725, 6.0
    %v790 = vmin.f32 %v726, 6.0
    %v791 = vmin.f32 %v727, 6.0
    %v792 = vmin.f32 %v728, 6.0
    %v793 = vmin.f32 %v729, 6.0
    %v794 = vmin.f32 %v730, 6.0
    %v795 = vmin.f32 %v731, 6.0
    %v796 = vmin.f32 %v732, 6.0
    %v797 = vmin.f32 %v733, 6.0
    %v798 = vmin.f32 %v734, 6.0
    %v799 = vmin.f32 %v735, 6.0
    %v800 = vmin.f32 %v736, 6.0
    %v801 = vmin.f32 %v737, 6.0
    %v802 = vmin.f32 %v738, 6.0
    %v803 = vmin.f32 %v739, 6.0
    %v804 = vmin.f32 %v740, 6.0
    %v805 = vmin.f32 %v741, 6.0
    %v806 = vmin.f32 %v742, 6.0
    %v807 = vmin.f32 %v743, 6.0
    %v808 = vmin.f32 %v744, 6.0
    %v809 = vmin.f32 %v745, 6.0
    %v810 = vmin.f32 %v746, 6.0
    %v811 = vmin.f32 %v747, 6.0
    %v812 = vmin.f32 %v748, 6.0
    %v813 = vmin.f32 %v749, 6.0
    %v814 = vmin.f32 %v750, 6.0
    %v815 = vmin.f32 %v751, 6.0
    %v816 = vmin.f32 %v752, 6.0
    %v817 = vmin.f32 %v753, 6.0
    %v818 = vmin.f32 %v754, 6.0
    %v819 = vmin.f32 %v755, 6.0
    %v820 = vmin.f32 %v756, 6.0
    %v821 = vmin.f32 %v757, 6.0
    %v822 = vmin.f32 %v758, 6.0
    %v823 = vmin.f32 %v759, 6.0
    %v824 = vmin.f32 %v760, 6.0
    %v825 = vmin.f32 %v761, 6.0
    %v826 = vmin.f32 %v762, 6.0
    %v827 = vmin.f32 %v763, 6.0
    %v828 = vmin.f32 %v764, 6.0
    %v829 = vmin.f32 %v765, 6.0
    %v830 = vmin.f32 %v766, 6.0
    %v831 = vmin.f32 %v767, 6.0
    %v832 = vmin.f32 %v768, 6.0
    %v833 = vmin.f32 %v769, 6.0
    %v834 = vmin.f32 %v770, 6.0
    %v835 = vmin.f32 %v771, 6.0
    %v836 = vmin.f32 %v772, 6.0
    %v837 = vmin.f32 %v773, 6.0
    %v838 = vmin.f32 %v774, 6.0
    %v839 = vmin.f32 %v775, 6.0
    %v840 = vmin.f32 %v776, 6.0
    %v841 = vmin.f32 %v777, 6.0
    %v842 = vmin.f32 %v778, 6.0
    %v843 = vmin.f32 %v779, 6.0
    %v844 = vmin.f32 %v780, 6.0
    %v845 = vmin.f32 %v781, 6.0
    %v846 = vmin.f32 %v782, 6.0
    %v847 = vmin.f32 %v783, 6.0
    %v848 = vmin.f32 %v784, 6.0
    %v849 = vmin.f32 %v785, 6.0
    %v850 = vmin.f32 %v786, 6.0
    %v851 = vmin.f32 %v787, 6.0
    %v852 = vmul.f32 %v596, %v788
    %v853 = vmul.f32 %v597, %v789
    %v854 = vmul.f32 %v598, %v790
    %v855 = vmul.f32 %v599, %v791
    %v856 = vmul.f32 %v600, %v792
    %v857 = vmul.f32 %v601, %v793
    %v858 = vmul.f32 %v602, %v794
    %v859 = vmul.f32 %v603, %v795
    %v860 = vmul.f32 %v604, %v796
    %v861 = vmul.f32 %v605, %v797
    %v862 = vmul.f32 %v606, %v798
    %v863 = vmul.f32 %v607, %v799
    %v864 = vmul.f32 %v608, %v800
    %v865 = vmul.f32 %v609, %v801
    %v866 = vmul.f32 %v610, %v802
    %v867 = vmul.f32 %v611, %v803
    %v868 = vmul.f32 %v612, %v804
    %v869 = vmul.f32 %v613, %v805
    %v870 = vmul.f32 %v614, %v806
    %v871 = vmul.f32 %v615, %v807
    %v872 = vmul.f32 %v616, %v808
    %v873 = vmul.f32 %v617, %v809
    %v874 = vmul.f32 %v618, %v810
    %v875 = vmul.f32 %v619, %v811
    %v876 = vmul.f32 %v620, %v812
    %v877 = vmul.f32 %v621, %v813
    %v878 = vmul.f32 %v622, %v814
    %v879 = vmul.f32 %v623, %v815
    %v880 = vmul.f32 %v624, %v816
    %v881 = vmul.f32 %v625, %v817
    %v882 = vmul.f32 %v626, %v818
    %v883 = vmul.f32 %v627, %v819
    %v884 = vmul.f32 %v628, %v820
    %v885 = vmul.f32 %v629, %v821
    %v886 = vmul.f32 %v630, %v822
    %v887 = vmul.f32 %v631, %v823
    %v888 = vmul.f32 %v632, %v824
    %v889 = vmul.f32 %v633, %v825
    %v890 = vmul.f32 %v634, %v826
    %v891 = vmul.f32 %v635, %v827
    %v892 = vmul.f32 %v636, %v828
    %v893 = vmul.f32 %v637, %v829
    %v894 = vmul.f32 %v638, %v830
    %v895 = vmul.f32 %v639, %v831
    %v896 = vmul.f32 %v640, %v832
    %v897 = vmul.f32 %v641, %v833
    %v898 = vmul.f32 %v642, %v834
    %v899 = vmul.f32 %v643, %v835
    %v900 = vmul.f32 %v644, %v836
    %v901 = vmul.f32 %v645, %v837
    %v902 = vmul.f32 %v646, %v838
    %v903 = vmul.f32 %v647, %v839
    %v904 = vmul.f32 %v648, %v840
    %v905 = vmul.f32 %v649, %v841
    %v906 = vmul.f32 %v650, %v842
    %v907 = vmul.f32 %v651, %v843
    %v908 = vmul.f32 %v652, %v844
    %v909 = vmul.f32 %v653, %v845
    %v910 = vmul.f32 %v654, %v846
    %v911 = vmul.f32 %v655, %v847
    %v912 = vmul.f32 %v656, %v848
    %v913 = vmul.f32 %v657, %v849
    %v914 = vmul.f32 %v658, %v850
    %v915 = vmul.f32 %v659, %v851
    %v916 = vmul.f32 %v852, 0.16666667
    %v917 = vmul.f32 %v853, 0.16666667
    %v918 = vmul.f32 %v854, 0.16666667
    %v919 = vmul.f32 %v855, 0.16666667
    %v920 = vmul.f32 %v856, 0.16666667
    %v921 = vmul.f32 %v857, 0.16666667
    %v922 = vmul.f32 %v858, 0.16666667
    %v923 = vmul.f32 %v859, 0.16666667
    %v924 = vmul.f32 %v860, 0.16666667
    %v925 = vmul.f32 %v861, 0.16666667
    %v926 = vmul.f32 %v862, 0.16666667
    %v927 = vmul.f32 %v863, 0.16666667
    %v928 = vmul.f32 %v864, 0.16666667
    %v929 = vmul.f32 %v865, 0.16666667
    %v930 = vmul.f32 %v866, 0.16666667
    %v931 = vmul.f32 %v867, 0.16666667
    %v932 = vmul.f32 %v868, 0.16666667
    %v933 = vmul.f32 %v869, 0.16666667
    %v934 = vmul.f32 %v870, 0.16666667
    %v935 = vmul.f32 %v871, 0.16666667
    %v936 = vmul.f32 %v872, 0.16666667
    %v937 = vmul.f32 %v873, 0.16666667
    %v938 = vmul.f32 %v874, 0.16666667
    %v939 = vmul.f32 %v875, 0.16666667
    %v940 = vmul.f32 %v876, 0.16666667
    %v941 = vmul.f32 %v877, 0.16666667
    %v942 = vmul.f32 %v878, 0.16666667
    %v943 = vmul.f32 %v879, 0.16666667
    %v944 = vmul.f32 %v880, 0.16666667
    %v945 = vmul.f32 %v881, 0.16666667
    %v946 = vmul.f32 %v882, 0.16666667
    %v947 = vmul.f32 %v883, 0.16666667
    %v948 = vmul.f32 %v884, 0.16666667
    %v949 = vmul.f32 %v885, 0.16666667
    %v950 = vmul.f32 %v886, 0.16666667
    %v951 = vmul.f32 %v887, 0.16666667
    %v952 = vmul.f32 %v888, 0.16666667
    %v953 = vmul.f32 %v889, 0.16666667
    %v954 = vmul.f32 %v890, 0.16666667
    %v955 = vmul.f32 %v891, 0.16666667
    %v956 = vmul.f32 %v892, 0.16666667
    %v957 = vmul.f32 %v893, 0.16666667
    %v958 = vmul.f32 %v894, 0.16666667
    %v959 = vmul.f32 %v895, 0.16666667
    %v960 = vmul.f32 %v896, 0.16666667
    %v961 = vmul.f32 %v897, 0.16666667
    %v962 = vmul.f32 %v898, 0.16666667
    %v963 = vmul.f32 %v899, 0.16666667
    %v964 = vmul.f32 %v900, 0.16666667
    %v965 = vmul.f32 %v901, 0.16666667
    %v966 = vmul.f32 %v902, 0.16666667
    %v967 = vmul.f32 %v903, 0.16666667
    %v968 = vmul.f32 %v904, 0.16666667
    %v969 = vmul.f32 %v905, 0.16666667
    %v970 = vmul.f32 %v906, 0.16666667
    %v971 = vmul.f32 %v907, 0.16666667
    %v972 = vmul.f32 %v908, 0.16666667
    %v973 = vmul.f32 %v909, 0.16666667
    %v974 = vmul.f32 %v910, 0.16666667
    %v975 = vmul.f32 %v911, 0.16666667
    %v976 = vmul.f32 %v912, 0.16666667
    %v977 = vmul.f32 %v913, 0.16666667
    %v978 = vmul.f32 %v914, 0.16666667
    %v979 = vmul.f32 %v915, 0.16666667
    %v980 = vpack.c.bf16 %v917, %v916
    %v981 = vpack.c.bf16 %v919, %v918
    %v982 = vpack.c.bf16 %v921, %v920
    %v983 = vpack.c.bf16 %v923, %v922
    %v984 = vpack.c.bf16 %v925, %v924
    %v985 = vpack.c.bf16 %v927, %v926
    %v986 = vpack.c.bf16 %v929, %v928
    %v987 = vpack.c.bf16 %v931, %v930
    %v988 = vpack.c.bf16 %v933, %v932
    %v989 = vpack.c.bf16 %v935, %v934
    %v990 = vpack.c.bf16 %v937, %v936
    %v991 = vpack.c.bf16 %v939, %v938
    %v992 = vpack.c.bf16 %v941, %v940
    %v993 = vpack.c.bf16 %v943, %v942
    %v994 = vpack.c.bf16 %v945, %v944
    %v995 = vpack.c.bf16 %v947, %v946
    %v996 = vpack.c.bf16 %v949, %v948
    %v997 = vpack.c.bf16 %v951, %v950
    %v998 = vpack.c.bf16 %v953, %v952
    %v999 = vpack.c.bf16 %v955, %v954
    %v1000 = vpack.c.bf16 %v957, %v956
    %v1001 = vpack.c.bf16 %v959, %v958
    %v1002 = vpack.c.bf16 %v961, %v960
    %v1003 = vpack.c.bf16 %v963, %v962
    %v1004 = vpack.c.bf16 %v965, %v964
    %v1005 = vpack.c.bf16 %v967, %v966
    %v1006 = vpack.c.bf16 %v969, %v968
    %v1007 = vpack.c.bf16 %v971, %v970
    %v1008 = vpack.c.bf16 %v973, %v972
    %v1009 = vpack.c.bf16 %v975, %v974
    %v1010 = vpack.c.bf16 %v977, %v976
    %v1011 = vpack.c.bf16 %v979, %v978
    %v1044 = vunpack.c.l.b16 %v980
    %v1045 = vunpack.c.h.b16 %v980
    %v1046 = vunpack.c.l.b16 %v981
    %v1047 = vunpack.c.h.b16 %v981
    %v1048 = vunpack.c.l.b16 %v982
    %v1049 = vunpack.c.h.b16 %v982
    %v1050 = vunpack.c.l.b16 %v983
    %v1051 = vunpack.c.h.b16 %v983
    %v1052 = vunpack.c.l.b16 %v984
    %v1053 = vunpack.c.h.b16 %v984
    %v1054 = vunpack.c.l.b16 %v985
    %v1055 = vunpack.c.h.b16 %v985
    %v1056 = vunpack.c.l.b16 %v986
    %v1057 = vunpack.c.h.b16 %v986
    %v1058 = vunpack.c.l.b16 %v987
    %v1059 = vunpack.c.h.b16 %v987
    %v1060 = vunpack.c.l.b16 %v988
    %v1061 = vunpack.c.h.b16 %v988
    %v1062 = vunpack.c.l.b16 %v989
    %v1063 = vunpack.c.h.b16 %v989
    %v1064 = vunpack.c.l.b16 %v990
    %v1065 = vunpack.c.h.b16 %v990
    %v1066 = vunpack.c.l.b16 %v991
    %v1067 = vunpack.c.h.b16 %v991
    %v1068 = vunpack.c.l.b16 %v992
    %v1069 = vunpack.c.h.b16 %v992
    %v1070 = vunpack.c.l.b16 %v993
    %v1071 = vunpack.c.h.b16 %v993
    %v1072 = vunpack.c.l.b16 %v994
    %v1073 = vunpack.c.h.b16 %v994
    %v1074 = vunpack.c.l.b16 %v995
    %v1075 = vunpack.c.h.b16 %v995
    %v1076 = vunpack.c.l.b16 %v996
    %v1077 = vunpack.c.h.b16 %v996
    %v1078 = vunpack.c.l.b16 %v997
    %v1079 = vunpack.c.h.b16 %v997
    %v1080 = vunpack.c.l.b16 %v998
    %v1081 = vunpack.c.h.b16 %v998
    %v1082 = vunpack.c.l.b16 %v999
    %v1083 = vunpack.c.h.b16 %v999
    %v1084 = vunpack.c.l.b16 %v1000
    %v1085 = vunpack.c.h.b16 %v1000
    %v1086 = vunpack.c.l.b16 %v1001
    %v1087 = vunpack.c.h.b16 %v1001
    %v1088 = vunpack.c.l.b16 %v1002
    %v1089 = vunpack.c.h.b16 %v1002
    %v1090 = vunpack.c.l.b16 %v1003
    %v1091 = vunpack.c.h.b16 %v1003
    %v1092 = vunpack.c.l.b16 %v1004
    %v1093 = vunpack.c.h.b16 %v1004
    %v1094 = vunpack.c.l.b16 %v1005
    %v1095 = vunpack.c.h.b16 %v1005
    %v1096 = vunpack.c.l.b16 %v1006
    %v1097 = vunpack.c.h.b16 %v1006
    %v1098 = vunpack.c.l.b16 %v1007
    %v1099 = vunpack.c.h.b16 %v1007
    %v1100 = vunpack.c.l.b16 %v1008
    %v1101 = vunpack.c.h.b16 %v1008
    %v1102 = vunpack.c.l.b16 %v1009
    %v1103 = vunpack.c.h.b16 %v1009
    %v1104 = vunpack.c.l.b16 %v1010
    %v1105 = vunpack.c.h.b16 %v1010
    %v1106 = vunpack.c.l.b16 %v1011
    %v1107 = vunpack.c.h.b16 %v1011
    %v1108 = vpack.c.b16 %v1044, %v1044
    %v1109 = vpack.c.b16 %v1045, %v1045
    %v1110 = vpack.c.b16 %v1046, %v1046
    %v1111 = vpack.c.b16 %v1047, %v1047
    %v1112 = vpack.c.b16 %v1048, %v1048
    %v1113 = vpack.c.b16 %v1049, %v1049
    %v1114 = vpack.c.b16 %v1050, %v1050
    %v1115 = vpack.c.b16 %v1051, %v1051
    %v1116 = vpack.c.b16 %v1052, %v1052
    %v1117 = vpack.c.b16 %v1053, %v1053
    %v1118 = vpack.c.b16 %v1054, %v1054
    %v1119 = vpack.c.b16 %v1055, %v1055
    %v1120 = vpack.c.b16 %v1056, %v1056
    %v1121 = vpack.c.b16 %v1057, %v1057
    %v1122 = vpack.c.b16 %v1058, %v1058
    %v1123 = vpack.c.b16 %v1059, %v1059
    %v1124 = vpack.c.b16 %v1060, %v1060
    %v1125 = vpack.c.b16 %v1061, %v1061
    %v1126 = vpack.c.b16 %v1062, %v1062
    %v1127 = vpack.c.b16 %v1063, %v1063
    %v1128 = vpack.c.b16 %v1064, %v1064
    %v1129 = vpack.c.b16 %v1065, %v1065
    %v1130 = vpack.c.b16 %v1066, %v1066
    %v1131 = vpack.c.b16 %v1067, %v1067
    %v1132 = vpack.c.b16 %v1068, %v1068
    %v1133 = vpack.c.b16 %v1069, %v1069
    %v1134 = vpack.c.b16 %v1070, %v1070
    %v1135 = vpack.c.b16 %v1071, %v1071
    %v1136 = vpack.c.b16 %v1072, %v1072
    %v1137 = vpack.c.b16 %v1073, %v1073
    %v1138 = vpack.c.b16 %v1074, %v1074
    %v1139 = vpack.c.b16 %v1075, %v1075
    %v1140 = vpack.c.b16 %v1076, %v1076
    %v1141 = vpack.c.b16 %v1077, %v1077
    %v1142 = vpack.c.b16 %v1078, %v1078
    %v1143 = vpack.c.b16 %v1079, %v1079
    %v1144 = vpack.c.b16 %v1080, %v1080
    %v1145 = vpack.c.b16 %v1081, %v1081
    %v1146 = vpack.c.b16 %v1082, %v1082
    %v1147 = vpack.c.b16 %v1083, %v1083
    %v1148 = vpack.c.b16 %v1084, %v1084
    %v1149 = vpack.c.b16 %v1085, %v1085
    %v1150 = vpack.c.b16 %v1086, %v1086
    %v1151 = vpack.c.b16 %v1087, %v1087
    %v1152 = vpack.c.b16 %v1088, %v1088
    %v1153 = vpack.c.b16 %v1089, %v1089
    %v1154 = vpack.c.b16 %v1090, %v1090
    %v1155 = vpack.c.b16 %v1091, %v1091
    %v1156 = vpack.c.b16 %v1092, %v1092
    %v1157 = vpack.c.b16 %v1093, %v1093
    %v1158 = vpack.c.b16 %v1094, %v1094
    %v1159 = vpack.c.b16 %v1095, %v1095
    %v1160 = vpack.c.b16 %v1096, %v1096
    %v1161 = vpack.c.b16 %v1097, %v1097
    %v1162 = vpack.c.b16 %v1098, %v1098
    %v1163 = vpack.c.b16 %v1099, %v1099
    %v1164 = vpack.c.b16 %v1100, %v1100
    %v1165 = vpack.c.b16 %v1101, %v1101
    %v1166 = vpack.c.b16 %v1102, %v1102
    %v1167 = vpack.c.b16 %v1103, %v1103
    %v1168 = vpack.c.b16 %v1104, %v1104
    %v1169 = vpack.c.b16 %v1105, %v1105
    %v1170 = vpack.c.b16 %v1106, %v1106
    %v1171 = vpack.c.b16 %v1107, %v1107
    %1236 = vst [vmem:[#allocation2] sm:$0xf] %v1108
    %1237 = vst [vmem:[#allocation2 + $0x4] sm:$0xf] %v1109
    %1238 = vst [vmem:[#allocation2 + $0x8] sm:$0xf] %v1110
    %1239 = vst [vmem:[#allocation2 + $0xc] sm:$0xf] %v1111
    %1240 = vst [vmem:[#allocation2 + $0x10] sm:$0xf] %v1112
    %1241 = vst [vmem:[#allocation2 + $0x14] sm:$0xf] %v1113
    %1242 = vst [vmem:[#allocation2 + $0x18] sm:$0xf] %v1114
    %1243 = vst [vmem:[#allocation2 + $0x1c] sm:$0xf] %v1115
    %1244 = vst [vmem:[#allocation2 + $0x20] sm:$0xf] %v1116
    %1245 = vst [vmem:[#allocation2 + $0x24] sm:$0xf] %v1117
    %1246 = vst [vmem:[#allocation2 + $0x28] sm:$0xf] %v1118
    %1247 = vst [vmem:[#allocation2 + $0x2c] sm:$0xf] %v1119
    %1248 = vst [vmem:[#allocation2 + $0x30] sm:$0xf] %v1120
    %1249 = vst [vmem:[#allocation2 + $0x34] sm:$0xf] %v1121
    %1250 = vst [vmem:[#allocation2 + $0x38] sm:$0xf] %v1122
    %1251 = vst [vmem:[#allocation2 + $0x3c] sm:$0xf] %v1123
    %1252 = vst [vmem:[#allocation2 + $0x40] sm:$0xf] %v1124
    %1253 = vst [vmem:[#allocation2 + $0x44] sm:$0xf] %v1125
    %1254 = vst [vmem:[#allocation2 + $0x48] sm:$0xf] %v1126
    %1255 = vst [vmem:[#allocation2 + $0x4c] sm:$0xf] %v1127
    %1256 = vst [vmem:[#allocation2 + $0x50] sm:$0xf] %v1128
    %1257 = vst [vmem:[#allocation2 + $0x54] sm:$0xf] %v1129
    %1258 = vst [vmem:[#allocation2 + $0x58] sm:$0xf] %v1130
    %1259 = vst [vmem:[#allocation2 + $0x5c] sm:$0xf] %v1131
    %1260 = vst [vmem:[#allocation2 + $0x60] sm:$0xf] %v1132
    %1261 = vst [vmem:[#allocation2 + $0x64] sm:$0xf] %v1133
    %1262 = vst [vmem:[#allocation2 + $0x68] sm:$0xf] %v1134
    %1263 = vst [vmem:[#allocation2 + $0x6c] sm:$0xf] %v1135
    %1264 = vst [vmem:[#allocation2 + $0x70] sm:$0xf] %v1136
    %1265 = vst [vmem:[#allocation2 + $0x74] sm:$0xf] %v1137
    %1266 = vst [vmem:[#allocation2 + $0x78] sm:$0xf] %v1138
    %1267 = vst [vmem:[#allocation2 + $0x7c] sm:$0xf] %v1139
    %1268 = vst [vmem:[#allocation2 + $0x80] sm:$0xf] %v1140
    %1269 = vst [vmem:[#allocation2 + $0x84] sm:$0xf] %v1141
    %1270 = vst [vmem:[#allocation2 + $0x88] sm:$0xf] %v1142
    %1271 = vst [vmem:[#allocation2 + $0x8c] sm:$0xf] %v1143
    %1272 = vst [vmem:[#allocation2 + $0x90] sm:$0xf] %v1144
    %1273 = vst [vmem:[#allocation2 + $0x94] sm:$0xf] %v1145
    %1274 = vst [vmem:[#allocation2 + $0x98] sm:$0xf] %v1146
    %1275 = vst [vmem:[#allocation2 + $0x9c] sm:$0xf] %v1147
    %1276 = vst [vmem:[#allocation2 + $0xa0] sm:$0xf] %v1148
    %1277 = vst [vmem:[#allocation2 + $0xa4] sm:$0xf] %v1149
    %1278 = vst [vmem:[#allocation2 + $0xa8] sm:$0xf] %v1150
    %1279 = vst [vmem:[#allocation2 + $0xac] sm:$0xf] %v1151
    %1280 = vst [vmem:[#allocation2 + $0xb0] sm:$0xf] %v1152
    %1281 = vst [vmem:[#allocation2 + $0xb4] sm:$0xf] %v1153
    %1282 = vst [vmem:[#allocation2 + $0xb8] sm:$0xf] %v1154
    %1283 = vst [vmem:[#allocation2 + $0xbc] sm:$0xf] %v1155
    %1284 = vst [vmem:[#allocation2 + $0xc0] sm:$0xf] %v1156
    %1285 = vst [vmem:[#allocation2 + $0xc4] sm:$0xf] %v1157
    %1286 = vst [vmem:[#allocation2 + $0xc8] sm:$0xf] %v1158
    %1287 = vst [vmem:[#allocation2 + $0xcc] sm:$0xf] %v1159
    %1288 = vst [vmem:[#allocation2 + $0xd0] sm:$0xf] %v1160
    %1289 = vst [vmem:[#allocation2 + $0xd4] sm:$0xf] %v1161
    %1290 = vst [vmem:[#allocation2 + $0xd8] sm:$0xf] %v1162
    %1291 = vst [vmem:[#allocation2 + $0xdc] sm:$0xf] %v1163
    %1292 = vst [vmem:[#allocation2 + $0xe0] sm:$0xf] %v1164
    %1293 = vst [vmem:[#allocation2 + $0xe4] sm:$0xf] %v1165
    %1294 = vst [vmem:[#allocation2 + $0xe8] sm:$0xf] %v1166
    %1295 = vst [vmem:[#allocation2 + $0xec] sm:$0xf] %v1167
    %1296 = vst [vmem:[#allocation2 + $0xf0] sm:$0xf] %v1168
    %1297 = vst [vmem:[#allocation2 + $0xf4] sm:$0xf] %v1169
    %1298 = vst [vmem:[#allocation2 + $0xf8] sm:$0xf] %v1170
    %1299 = vst [vmem:[#allocation2 + $0xfc] sm:$0xf] %v1171
    %v1300 = vld [vmem:[%s4] sm:$0xf]
    %v1302 = vsel %vm225, %v1300, 0
    %1304 = vmatprep.subr.bf16.mxu0 0
    %1305 = vmatpush1.bf16.msra.mxu0 %v1302
    %1306 = vmatprep.subr.bf16.mxu0 0
    %1307 = vmatpush1.bf16.msra.mxu0 0
    %1308 = vmatprep.subr.bf16.mxu0 0
    %1309 = vmatpush1.bf16.msra.mxu0 0
    %1310 = vmatprep.subr.bf16.mxu0 0
    %1311 = vmatpush1.bf16.msra.mxu0 0
    %1312 = vmatprep.subr.bf16.mxu0 0
    %1313 = vmatpush1.bf16.msra.mxu0 0
    %1314 = vmatprep.subr.bf16.mxu0 0
    %1315 = vmatpush1.bf16.msra.mxu0 0
    %1316 = vmatprep.subr.bf16.mxu0 0
    %1317 = vmatpush1.bf16.msra.mxu0 0
    %1318 = vmatprep.subr.bf16.mxu0 0
    %1319 = vmatpush1.bf16.msra.mxu0 0
    %1320 = vmatprep.subr.bf16.mxu0 0
    %1321 = vmatpush1.bf16.msra.mxu0 0
    %1322 = vmatprep.subr.bf16.mxu0 0
    %1323 = vmatpush1.bf16.msra.mxu0 0
    %1324 = vmatprep.subr.bf16.mxu0 0
    %1325 = vmatpush1.bf16.msra.mxu0 0
    %1326 = vmatprep.subr.bf16.mxu0 0
    %1327 = vmatpush1.bf16.msra.mxu0 0
    %1328 = vmatprep.subr.bf16.mxu0 0
    %1329 = vmatpush1.bf16.msra.mxu0 0
    %1330 = vmatprep.subr.bf16.mxu0 0
    %1331 = vmatpush1.bf16.msra.mxu0 0
    %1332 = vmatprep.subr.bf16.mxu0 0
    %1333 = vmatpush1.bf16.msra.mxu0 0
    %1334 = vmatprep.subr.bf16.mxu0 0
    %1335 = vmatpush1.bf16.msra.mxu0 0
    %1336 = vmatprep.mubr.bf16.mxu0 0
    %1337 = vmatmul.mubr.bf16.gmra.mrb[0].mxu0 %v130
    %v1338 = vpop.f32.mrb[0].mxu0
    %v1339 = vadd.f32 0.0, %v1338
    %v1340 = vpop.f32.mrb[0].mxu0
    %v1341 = vpop.f32.mrb[0].mxu0
    %v1342 = vadd.f32 0.0, %v1341
    %v1343 = vpop.f32.mrb[0].mxu0
    %1344 = vmatprep.mubr.bf16.mxu0 0
    %1345 = vmatmul.mubr.bf16.gmra.mrb[0].mxu0 %v133
    %v1346 = vpop.f32.mrb[0].mxu0
    %v1347 = vadd.f32 0.0, %v1346
    %v1348 = vpop.f32.mrb[0].mxu0
    %v1349 = vpop.f32.mrb[0].mxu0
    %v1350 = vadd.f32 0.0, %v1349
    %v1351 = vpop.f32.mrb[0].mxu0
    %1352 = vmatprep.mubr.bf16.mxu0 0
    %1353 = vmatmul.mubr.bf16.gmra.mrb[0].mxu0 %v136
    %v1354 = vpop.f32.mrb[0].mxu0
    %v1355 = vadd.f32 0.0, %v1354
    %v1356 = vpop.f32.mrb[0].mxu0
    %v1357 = vpop.f32.mrb[0].mxu0
    %v1358 = vadd.f32 0.0, %v1357
    %v1359 = vpop.f32.mrb[0].mxu0
    %1360 = vmatprep.mubr.bf16.mxu0 0
    %1361 = vmatmul.mubr.bf16.gmra.mrb[0].mxu0 %v139
    %v1362 = vpop.f32.mrb[0].mxu0
    %v1363 = vadd.f32 0.0, %v1362
    %v1364 = vpop.f32.mrb[0].mxu0
    %v1365 = vpop.f32.mrb[0].mxu0
    %v1366 = vadd.f32 0.0, %v1365
    %v1367 = vpop.f32.mrb[0].mxu0
    %1368 = vmatprep.mubr.bf16.mxu0 0
    %1369 = vmatmul.mubr.bf16.gmra.mrb[0].mxu0 %v142
    %v1370 = vpop.f32.mrb[0].mxu0
    %v1371 = vadd.f32 0.0, %v1370
    %v1372 = vpop.f32.mrb[0].mxu0
    %v1373 = vpop.f32.mrb[0].mxu0
    %v1374 = vadd.f32 0.0, %v1373
    %v1375 = vpop.f32.mrb[0].mxu0
    %1376 = vmatprep.mubr.bf16.mxu0 0
    %1377 = vmatmul.mubr.bf16.gmra.mrb[0].mxu0 %v145
    %v1378 = vpop.f32.mrb[0].mxu0
    %v1379 = vadd.f32 0.0, %v1378
    %v1380 = vpop.f32.mrb[0].mxu0
    %v1381 = vpop.f32.mrb[0].mxu0
    %v1382 = vadd.f32 0.0, %v1381
    %v1383 = vpop.f32.mrb[0].mxu0
    %1384 = vmatprep.mubr.bf16.mxu0 0
    %1385 = vmatmul.mubr.bf16.gmra.mrb[0].mxu0 %v148
    %v1386 = vpop.f32.mrb[0].mxu0
    %v1387 = vadd.f32 0.0, %v1386
    %v1388 = vpop.f32.mrb[0].mxu0
    %v1389 = vpop.f32.mrb[0].mxu0
    %v1390 = vadd.f32 0.0, %v1389
    %v1391 = vpop.f32.mrb[0].mxu0
    %1392 = vmatprep.mubr.bf16.mxu0 0
    %1393 = vmatmul.mubr.bf16.gmra.mrb[0].mxu0 %v151
    %v1394 = vpop.f32.mrb[0].mxu0
    %v1395 = vadd.f32 0.0, %v1394
    %v1396 = vpop.f32.mrb[0].mxu0
    %v1397 = vpop.f32.mrb[0].mxu0
    %v1398 = vadd.f32 0.0, %v1397
    %v1399 = vpop.f32.mrb[0].mxu0
    %1400 = vmatprep.mubr.bf16.mxu0 0
    %1401 = vmatmul.mubr.bf16.gmra.mrb[0].mxu0 %v154
    %v1402 = vpop.f32.mrb[0].mxu0
    %v1403 = vadd.f32 0.0, %v1402
    %v1404 = vpop.f32.mrb[0].mxu0
    %v1405 = vpop.f32.mrb[0].mxu0
    %v1406 = vadd.f32 0.0, %v1405
    %v1407 = vpop.f32.mrb[0].mxu0
    %1408 = vmatprep.mubr.bf16.mxu0 0
    %1409 = vmatmul.mubr.bf16.gmra.mrb[0].mxu0 %v157
    %v1410 = vpop.f32.mrb[0].mxu0
    %v1411 = vadd.f32 0.0, %v1410
    %v1412 = vpop.f32.mrb[0].mxu0
    %v1413 = vpop.f32.mrb[0].mxu0
    %v1414 = vadd.f32 0.0, %v1413
    %v1415 = vpop.f32.mrb[0].mxu0
    %1416 = vmatprep.mubr.bf16.mxu0 0
    %1417 = vmatmul.mubr.bf16.gmra.mrb[0].mxu0 %v160
    %v1418 = vpop.f32.mrb[0].mxu0
    %v1419 = vadd.f32 0.0, %v1418
    %v1420 = vpop.f32.mrb[0].mxu0
    %v1421 = vpop.f32.mrb[0].mxu0
    %v1422 = vadd.f32 0.0, %v1421
    %v1423 = vpop.f32.mrb[0].mxu0
    %1424 = vmatprep.mubr.bf16.mxu0 0
    %1425 = vmatmul.mubr.bf16.gmra.mrb[0].mxu0 %v163
    %v1426 = vpop.f32.mrb[0].mxu0
    %v1427 = vadd.f32 0.0, %v1426
    %v1428 = vpop.f32.mrb[0].mxu0
    %v1429 = vpop.f32.mrb[0].mxu0
    %v1430 = vadd.f32 0.0, %v1429
    %v1431 = vpop.f32.mrb[0].mxu0
    %1432 = vmatprep.mubr.bf16.mxu0 0
    %1433 = vmatmul.mubr.bf16.gmra.mrb[0].mxu0 %v166
    %v1434 = vpop.f32.mrb[0].mxu0
    %v1435 = vadd.f32 0.0, %v1434
    %v1436 = vpop.f32.mrb[0].mxu0
    %v1437 = vpop.f32.mrb[0].mxu0
    %v1438 = vadd.f32 0.0, %v1437
    %v1439 = vpop.f32.mrb[0].mxu0
    %1440 = vmatprep.mubr.bf16.mxu0 0
    %1441 = vmatmul.mubr.bf16.gmra.mrb[0].mxu0 %v169
    %v1442 = vpop.f32.mrb[0].mxu0
    %v1443 = vadd.f32 0.0, %v1442
    %v1444 = vpop.f32.mrb[0].mxu0
    %v1445 = vpop.f32.mrb[0].mxu0
    %v1446 = vadd.f32 0.0, %v1445
    %v1447 = vpop.f32.mrb[0].mxu0
    %1448 = vmatprep.mubr.bf16.mxu0 0
    %1449 = vmatmul.mubr.bf16.gmra.mrb[0].mxu0 %v172
    %v1450 = vpop.f32.mrb[0].mxu0
    %v1451 = vadd.f32 0.0, %v1450
    %v1452 = vpop.f32.mrb[0].mxu0
    %v1453 = vpop.f32.mrb[0].mxu0
    %v1454 = vadd.f32 0.0, %v1453
    %v1455 = vpop.f32.mrb[0].mxu0
    %1456 = vmatprep.mubr.bf16.mxu0 0
    %1457 = vmatmul.mubr.bf16.gmra.mrb[0].mxu0 %v175
    %v1458 = vpop.f32.mrb[0].mxu0
    %v1459 = vadd.f32 0.0, %v1458
    %v1460 = vpop.f32.mrb[0].mxu0
    %v1461 = vpop.f32.mrb[0].mxu0
    %v1462 = vadd.f32 0.0, %v1461
    %v1463 = vpop.f32.mrb[0].mxu0
    %1464 = vmatprep.mubr.bf16.mxu0 0
    %1465 = vmatmul.mubr.bf16.gmra.mrb[0].mxu0 %v178
    %v1466 = vpop.f32.mrb[0].mxu0
    %v1467 = vadd.f32 0.0, %v1466
    %v1468 = vpop.f32.mrb[0].mxu0
    %v1469 = vpop.f32.mrb[0].mxu0
    %v1470 = vadd.f32 0.0, %v1469
    %v1471 = vpop.f32.mrb[0].mxu0
    %1472 = vmatprep.mubr.bf16.mxu0 0
    %1473 = vmatmul.mubr.bf16.gmra.mrb[0].mxu0 %v181
    %v1474 = vpop.f32.mrb[0].mxu0
    %v1475 = vadd.f32 0.0, %v1474
    %v1476 = vpop.f32.mrb[0].mxu0
    %v1477 = vpop.f32.mrb[0].mxu0
    %v1478 = vadd.f32 0.0, %v1477
    %v1479 = vpop.f32.mrb[0].mxu0
    %1480 = vmatprep.mubr.bf16.mxu0 0
    %1481 = vmatmul.mubr.bf16.gmra.mrb[0].mxu0 %v184
    %v1482 = vpop.f32.mrb[0].mxu0
    %v1483 = vadd.f32 0.0, %v1482
    %v1484 = vpop.f32.mrb[0].mxu0
    %v1485 = vpop.f32.mrb[0].mxu0
    %v1486 = vadd.f32 0.0, %v1485
    %v1487 = vpop.f32.mrb[0].mxu0
    %1488 = vmatprep.mubr.bf16.mxu0 0
    %1489 = vmatmul.mubr.bf16.gmra.mrb[0].mxu0 %v187
    %v1490 = vpop.f32.mrb[0].mxu0
    %v1491 = vadd.f32 0.0, %v1490
    %v1492 = vpop.f32.mrb[0].mxu0
    %v1493 = vpop.f32.mrb[0].mxu0
    %v1494 = vadd.f32 0.0, %v1493
    %v1495 = vpop.f32.mrb[0].mxu0
    %1496 = vmatprep.mubr.bf16.mxu0 0
    %1497 = vmatmul.mubr.bf16.gmra.mrb[0].mxu0 %v190
    %v1498 = vpop.f32.mrb[0].mxu0
    %v1499 = vadd.f32 0.0, %v1498
    %v1500 = vpop.f32.mrb[0].mxu0
    %v1501 = vpop.f32.mrb[0].mxu0
    %v1502 = vadd.f32 0.0, %v1501
    %v1503 = vpop.f32.mrb[0].mxu0
    %1504 = vmatprep.mubr.bf16.mxu0 0
    %1505 = vmatmul.mubr.bf16.gmra.mrb[0].mxu0 %v193
    %v1506 = vpop.f32.mrb[0].mxu0
    %v1507 = vadd.f32 0.0, %v1506
    %v1508 = vpop.f32.mrb[0].mxu0
    %v1509 = vpop.f32.mrb[0].mxu0
    %v1510 = vadd.f32 0.0, %v1509
    %v1511 = vpop.f32.mrb[0].mxu0
    %1512 = vmatprep.mubr.bf16.mxu0 0
    %1513 = vmatmul.mubr.bf16.gmra.mrb[0].mxu0 %v196
    %v1514 = vpop.f32.mrb[0].mxu0
    %v1515 = vadd.f32 0.0, %v1514
    %v1516 = vpop.f32.mrb[0].mxu0
    %v1517 = vpop.f32.mrb[0].mxu0
    %v1518 = vadd.f32 0.0, %v1517
    %v1519 = vpop.f32.mrb[0].mxu0
    %1520 = vmatprep.mubr.bf16.mxu0 0
    %1521 = vmatmul.mubr.bf16.gmra.mrb[0].mxu0 %v199
    %v1522 = vpop.f32.mrb[0].mxu0
    %v1523 = vadd.f32 0.0, %v1522
    %v1524 = vpop.f32.mrb[0].mxu0
    %v1525 = vpop.f32.mrb[0].mxu0
    %v1526 = vadd.f32 0.0, %v1525
    %v1527 = vpop.f32.mrb[0].mxu0
    %1528 = vmatprep.mubr.bf16.mxu0 0
    %1529 = vmatmul.mubr.bf16.gmra.mrb[0].mxu0 %v202
    %v1530 = vpop.f32.mrb[0].mxu0
    %v1531 = vadd.f32 0.0, %v1530
    %v1532 = vpop.f32.mrb[0].mxu0
    %v1533 = vpop.f32.mrb[0].mxu0
    %v1534 = vadd.f32 0.0, %v1533
    %v1535 = vpop.f32.mrb[0].mxu0
    %1536 = vmatprep.mubr.bf16.mxu0 0
    %1537 = vmatmul.mubr.bf16.gmra.mrb[0].mxu0 %v205
    %v1538 = vpop.f32.mrb[0].mxu0
    %v1539 = vadd.f32 0.0, %v1538
    %v1540 = vpop.f32.mrb[0].mxu0
    %v1541 = vpop.f32.mrb[0].mxu0
    %v1542 = vadd.f32 0.0, %v1541
    %v1543 = vpop.f32.mrb[0].mxu0
    %1544 = vmatprep.mubr.bf16.mxu0 0
    %1545 = vmatmul.mubr.bf16.gmra.mrb[0].mxu0 %v208
    %v1546 = vpop.f32.mrb[0].mxu0
    %v1547 = vadd.f32 0.0, %v1546
    %v1548 = vpop.f32.mrb[0].mxu0
    %v1549 = vpop.f32.mrb[0].mxu0
    %v1550 = vadd.f32 0.0, %v1549
    %v1551 = vpop.f32.mrb[0].mxu0
    %1552 = vmatprep.mubr.bf16.mxu0 0
    %1553 = vmatmul.mubr.bf16.gmra.mrb[0].mxu0 %v211
    %v1554 = vpop.f32.mrb[0].mxu0
    %v1555 = vadd.f32 0.0, %v1554
    %v1556 = vpop.f32.mrb[0].mxu0
    %v1557 = vpop.f32.mrb[0].mxu0
    %v1558 = vadd.f32 0.0, %v1557
    %v1559 = vpop.f32.mrb[0].mxu0
    %1560 = vmatprep.mubr.bf16.mxu0 0
    %1561 = vmatmul.mubr.bf16.gmra.mrb[0].mxu0 %v214
    %v1562 = vpop.f32.mrb[0].mxu0
    %v1563 = vadd.f32 0.0, %v1562
    %v1564 = vpop.f32.mrb[0].mxu0
    %v1565 = vpop.f32.mrb[0].mxu0
    %v1566 = vadd.f32 0.0, %v1565
    %v1567 = vpop.f32.mrb[0].mxu0
    %1568 = vmatprep.mubr.bf16.mxu0 0
    %1569 = vmatmul.mubr.bf16.gmra.mrb[0].mxu0 %v217
    %v1570 = vpop.f32.mrb[0].mxu0
    %v1571 = vadd.f32 0.0, %v1570
    %v1572 = vpop.f32.mrb[0].mxu0
    %v1573 = vpop.f32.mrb[0].mxu0
    %v1574 = vadd.f32 0.0, %v1573
    %v1575 = vpop.f32.mrb[0].mxu0
    %1576 = vmatprep.mubr.bf16.mxu0 0
    %1577 = vmatmul.mubr.bf16.gmra.mrb[0].mxu0 %v220
    %v1578 = vpop.f32.mrb[0].mxu0
    %v1579 = vadd.f32 0.0, %v1578
    %v1580 = vpop.f32.mrb[0].mxu0
    %v1581 = vpop.f32.mrb[0].mxu0
    %v1582 = vadd.f32 0.0, %v1581
    %v1583 = vpop.f32.mrb[0].mxu0
    %1584 = vmatprep.mubr.bf16.mxu0 0
    %1585 = vmatmul.mubr.bf16.gmra.mrb[0].mxu0 %v223
    %v1586 = vpop.f32.mrb[0].mxu0
    %v1587 = vadd.f32 0.0, %v1586
    %v1588 = vpop.f32.mrb[0].mxu0
    %v1589 = vpop.f32.mrb[0].mxu0
    %v1590 = vadd.f32 0.0, %v1589
    %v1591 = vpop.f32.mrb[0].mxu0
    %1592 = vdwg.mxu0
    %v1593 = vld [vmem:[%s5] sm:$0x1]
    %v1595 = vlaneseq
    %v1596 = vshrl.u32 %v1595, 7
    %v1597 = vsub.s32 0, %v1596
    %v1598 = vrot.slane %v1593, %v1597
    %v1600 = vmul.f32 %v1339, %v1598
    %v1601 = vmul.f32 %v1342, %v1598
    %v1602 = vmul.f32 %v1347, %v1598
    %v1603 = vmul.f32 %v1350, %v1598
    %v1604 = vmul.f32 %v1355, %v1598
    %v1605 = vmul.f32 %v1358, %v1598
    %v1606 = vmul.f32 %v1363, %v1598
    %v1607 = vmul.f32 %v1366, %v1598
    %v1608 = vmul.f32 %v1371, %v1598
    %v1609 = vmul.f32 %v1374, %v1598
    %v1610 = vmul.f32 %v1379, %v1598
    %v1611 = vmul.f32 %v1382, %v1598
    %v1612 = vmul.f32 %v1387, %v1598
    %v1613 = vmul.f32 %v1390, %v1598
    %v1614 = vmul.f32 %v1395, %v1598
    %v1615 = vmul.f32 %v1398, %v1598
    %v1616 = vmul.f32 %v1403, %v1598
    %v1617 = vmul.f32 %v1406, %v1598
    %v1618 = vmul.f32 %v1411, %v1598
    %v1619 = vmul.f32 %v1414, %v1598
    %v1620 = vmul.f32 %v1419, %v1598
    %v1621 = vmul.f32 %v1422, %v1598
    %v1622 = vmul.f32 %v1427, %v1598
    %v1623 = vmul.f32 %v1430, %v1598
    %v1624 = vmul.f32 %v1435, %v1598
    %v1625 = vmul.f32 %v1438, %v1598
    %v1626 = vmul.f32 %v1443, %v1598
    %v1627 = vmul.f32 %v1446, %v1598
    %v1628 = vmul.f32 %v1451, %v1598
    %v1629 = vmul.f32 %v1454, %v1598
    %v1630 = vmul.f32 %v1459, %v1598
    %v1631 = vmul.f32 %v1462, %v1598
    %v1632 = vmul.f32 %v1467, %v1598
    %v1633 = vmul.f32 %v1470, %v1598
    %v1634 = vmul.f32 %v1475, %v1598
    %v1635 = vmul.f32 %v1478, %v1598
    %v1636 = vmul.f32 %v1483, %v1598
    %v1637 = vmul.f32 %v1486, %v1598
    %v1638 = vmul.f32 %v1491, %v1598
    %v1639 = vmul.f32 %v1494, %v1598
    %v1640 = vmul.f32 %v1499, %v1598
    %v1641 = vmul.f32 %v1502, %v1598
    %v1642 = vmul.f32 %v1507, %v1598
    %v1643 = vmul.f32 %v1510, %v1598
    %v1644 = vmul.f32 %v1515, %v1598
    %v1645 = vmul.f32 %v1518, %v1598
    %v1646 = vmul.f32 %v1523, %v1598
    %v1647 = vmul.f32 %v1526, %v1598
    %v1648 = vmul.f32 %v1531, %v1598
    %v1649 = vmul.f32 %v1534, %v1598
    %v1650 = vmul.f32 %v1539, %v1598
    %v1651 = vmul.f32 %v1542, %v1598
    %v1652 = vmul.f32 %v1547, %v1598
    %v1653 = vmul.f32 %v1550, %v1598
    %v1654 = vmul.f32 %v1555, %v1598
    %v1655 = vmul.f32 %v1558, %v1598
    %v1656 = vmul.f32 %v1563, %v1598
    %v1657 = vmul.f32 %v1566, %v1598
    %v1658 = vmul.f32 %v1571, %v1598
    %v1659 = vmul.f32 %v1574, %v1598
    %v1660 = vmul.f32 %v1579, %v1598
    %v1661 = vmul.f32 %v1582, %v1598
    %v1662 = vmul.f32 %v1587, %v1598
    %v1663 = vmul.f32 %v1590, %v1598
    %v1664 = vld [vmem:[%s6] sm:$0x1]
    %v1666 = vlaneseq
    %v1667 = vshrl.u32 %v1666, 7
    %v1668 = vsub.s32 0, %v1667
    %v1669 = vrot.slane %v1664, %v1668
    %v1671 = vadd.f32 %v1600, %v1669
    %v1672 = vadd.f32 %v1601, %v1669
    %v1673 = vadd.f32 %v1602, %v1669
    %v1674 = vadd.f32 %v1603, %v1669
    %v1675 = vadd.f32 %v1604, %v1669
    %v1676 = vadd.f32 %v1605, %v1669
    %v1677 = vadd.f32 %v1606, %v1669
    %v1678 = vadd.f32 %v1607, %v1669
    %v1679 = vadd.f32 %v1608, %v1669
    %v1680 = vadd.f32 %v1609, %v1669
    %v1681 = vadd.f32 %v1610, %v1669
    %v1682 = vadd.f32 %v1611, %v1669
    %v1683 = vadd.f32 %v1612, %v1669
    %v1684 = vadd.f32 %v1613, %v1669
    %v1685 = vadd.f32 %v1614, %v1669
    %v1686 = vadd.f32 %v1615, %v1669
    %v1687 = vadd.f32 %v1616, %v1669
    %v1688 = vadd.f32 %v1617, %v1669
    %v1689 = vadd.f32 %v1618, %v1669
    %v1690 = vadd.f32 %v1619, %v1669
    %v1691 = vadd.f32 %v1620, %v1669
    %v1692 = vadd.f32 %v1621, %v1669
    %v1693 = vadd.f32 %v1622, %v1669
    %v1694 = vadd.f32 %v1623, %v1669
    %v1695 = vadd.f32 %v1624, %v1669
    %v1696 = vadd.f32 %v1625, %v1669
    %v1697 = vadd.f32 %v1626, %v1669
    %v1698 = vadd.f32 %v1627, %v1669
    %v1699 = vadd.f32 %v1628, %v1669
    %v1700 = vadd.f32 %v1629, %v1669
    %v1701 = vadd.f32 %v1630, %v1669
    %v1702 = vadd.f32 %v1631, %v1669
    %v1703 = vadd.f32 %v1632, %v1669
    %v1704 = vadd.f32 %v1633, %v1669
    %v1705 = vadd.f32 %v1634, %v1669
    %v1706 = vadd.f32 %v1635, %v1669
    %v1707 = vadd.f32 %v1636, %v1669
    %v1708 = vadd.f32 %v1637, %v1669
    %v1709 = vadd.f32 %v1638, %v1669
    %v1710 = vadd.f32 %v1639, %v1669
    %v1711 = vadd.f32 %v1640, %v1669
    %v1712 = vadd.f32 %v1641, %v1669
    %v1713 = vadd.f32 %v1642, %v1669
    %v1714 = vadd.f32 %v1643, %v1669
    %v1715 = vadd.f32 %v1644, %v1669
    %v1716 = vadd.f32 %v1645, %v1669
    %v1717 = vadd.f32 %v1646, %v1669
    %v1718 = vadd.f32 %v1647, %v1669
    %v1719 = vadd.f32 %v1648, %v1669
    %v1720 = vadd.f32 %v1649, %v1669
    %v1721 = vadd.f32 %v1650, %v1669
    %v1722 = vadd.f32 %v1651, %v1669
    %v1723 = vadd.f32 %v1652, %v1669
    %v1724 = vadd.f32 %v1653, %v1669
    %v1725 = vadd.f32 %v1654, %v1669
    %v1726 = vadd.f32 %v1655, %v1669
    %v1727 = vadd.f32 %v1656, %v1669
    %v1728 = vadd.f32 %v1657, %v1669
    %v1729 = vadd.f32 %v1658, %v1669
    %v1730 = vadd.f32 %v1659, %v1669
    %v1731 = vadd.f32 %v1660, %v1669
    %v1732 = vadd.f32 %v1661, %v1669
    %v1733 = vadd.f32 %v1662, %v1669
    %v1734 = vadd.f32 %v1663, %v1669
    %v1735 = vadd.f32 %v1671, 3.0
    %v1736 = vadd.f32 %v1672, 3.0
    %v1737 = vadd.f32 %v1673, 3.0
    %v1738 = vadd.f32 %v1674, 3.0
    %v1739 = vadd.f32 %v1675, 3.0
    %v1740 = vadd.f32 %v1676, 3.0
    %v1741 = vadd.f32 %v1677, 3.0
    %v1742 = vadd.f32 %v1678, 3.0
    %v1743 = vadd.f32 %v1679, 3.0
    %v1744 = vadd.f32 %v1680, 3.0
    %v1745 = vadd.f32 %v1681, 3.0
    %v1746 = vadd.f32 %v1682, 3.0
    %v1747 = vadd.f32 %v1683, 3.0
    %v1748 = vadd.f32 %v1684, 3.0
    %v1749 = vadd.f32 %v1685, 3.0
    %v1750 = vadd.f32 %v1686, 3.0
    %v1751 = vadd.f32 %v1687, 3.0
    %v1752 = vadd.f32 %v1688, 3.0
    %v1753 = vadd.f32 %v1689, 3.0
    %v1754 = vadd.f32 %v1690, 3.0
    %v1755 = vadd.f32 %v1691, 3.0
    %v1756 = vadd.f32 %v1692, 3.0
    %v1757 = vadd.f32 %v1693, 3.0
    %v1758 = vadd.f32 %v1694, 3.0
    %v1759 = vadd.f32 %v1695, 3.0
    %v1760 = vadd.f32 %v1696, 3.0
    %v1761 = vadd.f32 %v1697, 3.0
    %v1762 = vadd.f32 %v1698, 3.0
    %v1763 = vadd.f32 %v1699, 3.0
    %v1764 = vadd.f32 %v1700, 3.0
    %v1765 = vadd.f32 %v1701, 3.0
    %v1766 = vadd.f32 %v1702, 3.0
    %v1767 = vadd.f32 %v1703, 3.0
    %v1768 = vadd.f32 %v1704, 3.0
    %v1769 = vadd.f32 %v1705, 3.0
    %v1770 = vadd.f32 %v1706, 3.0
    %v1771 = vadd.f32 %v1707, 3.0
    %v1772 = vadd.f32 %v1708, 3.0
    %v1773 = vadd.f32 %v1709, 3.0
    %v1774 = vadd.f32 %v1710, 3.0
    %v1775 = vadd.f32 %v1711, 3.0
    %v1776 = vadd.f32 %v1712, 3.0
    %v1777 = vadd.f32 %v1713, 3.0
    %v1778 = vadd.f32 %v1714, 3.0
    %v1779 = vadd.f32 %v1715, 3.0
    %v1780 = vadd.f32 %v1716, 3.0
    %v1781 = vadd.f32 %v1717, 3.0
    %v1782 = vadd.f32 %v1718, 3.0
    %v1783 = vadd.f32 %v1719, 3.0
    %v1784 = vadd.f32 %v1720, 3.0
    %v1785 = vadd.f32 %v1721, 3.0
    %v1786 = vadd.f32 %v1722, 3.0
    %v1787 = vadd.f32 %v1723, 3.0
    %v1788 = vadd.f32 %v1724, 3.0
    %v1789 = vadd.f32 %v1725, 3.0
    %v1790 = vadd.f32 %v1726, 3.0
    %v1791 = vadd.f32 %v1727, 3.0
    %v1792 = vadd.f32 %v1728, 3.0
    %v1793 = vadd.f32 %v1729, 3.0
    %v1794 = vadd.f32 %v1730, 3.0
    %v1795 = vadd.f32 %v1731, 3.0
    %v1796 = vadd.f32 %v1732, 3.0
    %v1797 = vadd.f32 %v1733, 3.0
    %v1798 = vadd.f32 %v1734, 3.0
    %v1799 = vmax.f32 %v1735, 0.0
    %v1800 = vmax.f32 %v1736, 0.0
    %v1801 = vmax.f32 %v1737, 0.0
    %v1802 = vmax.f32 %v1738, 0.0
    %v1803 = vmax.f32 %v1739, 0.0
    %v1804 = vmax.f32 %v1740, 0.0
    %v1805 = vmax.f32 %v1741, 0.0
    %v1806 = vmax.f32 %v1742, 0.0
    %v1807 = vmax.f32 %v1743, 0.0
    %v1808 = vmax.f32 %v1744, 0.0
    %v1809 = vmax.f32 %v1745, 0.0
    %v1810 = vmax.f32 %v1746, 0.0
    %v1811 = vmax.f32 %v1747, 0.0
    %v1812 = vmax.f32 %v1748, 0.0
    %v1813 = vmax.f32 %v1749, 0.0
    %v1814 = vmax.f32 %v1750, 0.0
    %v1815 = vmax.f32 %v1751, 0.0
    %v1816 = vmax.f32 %v1752, 0.0
    %v1817 = vmax.f32 %v1753, 0.0
    %v1818 = vmax.f32 %v1754, 0.0
    %v1819 = vmax.f32 %v1755, 0.0
    %v1820 = vmax.f32 %v1756, 0.0
    %v1821 = vmax.f32 %v1757, 0.0
    %v1822 = vmax.f32 %v1758, 0.0
    %v1823 = vmax.f32 %v1759, 0.0
    %v1824 = vmax.f32 %v1760, 0.0
    %v1825 = vmax.f32 %v1761, 0.0
    %v1826 = vmax.f32 %v1762, 0.0
    %v1827 = vmax.f32 %v1763, 0.0
    %v1828 = vmax.f32 %v1764, 0.0
    %v1829 = vmax.f32 %v1765, 0.0
    %v1830 = vmax.f32 %v1766, 0.0
    %v1831 = vmax.f32 %v1767, 0.0
    %v1832 = vmax.f32 %v1768, 0.0
    %v1833 = vmax.f32 %v1769, 0.0
    %v1834 = vmax.f32 %v1770, 0.0
    %v1835 = vmax.f32 %v1771, 0.0
    %v1836 = vmax.f32 %v1772, 0.0
    %v1837 = vmax.f32 %v1773, 0.0
    %v1838 = vmax.f32 %v1774, 0.0
    %v1839 = vmax.f32 %v1775, 0.0
    %v1840 = vmax.f32 %v1776, 0.0
    %v1841 = vmax.f32 %v1777, 0.0
    %v1842 = vmax.f32 %v1778, 0.0
    %v1843 = vmax.f32 %v1779, 0.0
    %v1844 = vmax.f32 %v1780, 0.0
    %v1845 = vmax.f32 %v1781, 0.0
    %v1846 = vmax.f32 %v1782, 0.0
    %v1847 = vmax.f32 %v1783, 0.0
    %v1848 = vmax.f32 %v1784, 0.0
    %v1849 = vmax.f32 %v1785, 0.0
    %v1850 = vmax.f32 %v1786, 0.0
    %v1851 = vmax.f32 %v1787, 0.0
    %v1852 = vmax.f32 %v1788, 0.0
    %v1853 = vmax.f32 %v1789, 0.0
    %v1854 = vmax.f32 %v1790, 0.0
    %v1855 = vmax.f32 %v1791, 0.0
    %v1856 = vmax.f32 %v1792, 0.0
    %v1857 = vmax.f32 %v1793, 0.0
    %v1858 = vmax.f32 %v1794, 0.0
    %v1859 = vmax.f32 %v1795, 0.0
    %v1860 = vmax.f32 %v1796, 0.0
    %v1861 = vmax.f32 %v1797, 0.0
    %v1862 = vmax.f32 %v1798, 0.0
    %v1863 = vmin.f32 %v1799, 6.0
    %v1864 = vmin.f32 %v1800, 6.0
    %v1865 = vmin.f32 %v1801, 6.0
    %v1866 = vmin.f32 %v1802, 6.0
    %v1867 = vmin.f32 %v1803, 6.0
    %v1868 = vmin.f32 %v1804, 6.0
    %v1869 = vmin.f32 %v1805, 6.0
    %v1870 = vmin.f32 %v1806, 6.0
    %v1871 = vmin.f32 %v1807, 6.0
    %v1872 = vmin.f32 %v1808, 6.0
    %v1873 = vmin.f32 %v1809, 6.0
    %v1874 = vmin.f32 %v1810, 6.0
    %v1875 = vmin.f32 %v1811, 6.0
    %v1876 = vmin.f32 %v1812, 6.0
    %v1877 = vmin.f32 %v1813, 6.0
    %v1878 = vmin.f32 %v1814, 6.0
    %v1879 = vmin.f32 %v1815, 6.0
    %v1880 = vmin.f32 %v1816, 6.0
    %v1881 = vmin.f32 %v1817, 6.0
    %v1882 = vmin.f32 %v1818, 6.0
    %v1883 = vmin.f32 %v1819, 6.0
    %v1884 = vmin.f32 %v1820, 6.0
    %v1885 = vmin.f32 %v1821, 6.0
    %v1886 = vmin.f32 %v1822, 6.0
    %v1887 = vmin.f32 %v1823, 6.0
    %v1888 = vmin.f32 %v1824, 6.0
    %v1889 = vmin.f32 %v1825, 6.0
    %v1890 = vmin.f32 %v1826, 6.0
    %v1891 = vmin.f32 %v1827, 6.0
    %v1892 = vmin.f32 %v1828, 6.0
    %v1893 = vmin.f32 %v1829, 6.0
    %v1894 = vmin.f32 %v1830, 6.0
    %v1895 = vmin.f32 %v1831, 6.0
    %v1896 = vmin.f32 %v1832, 6.0
    %v1897 = vmin.f32 %v1833, 6.0
    %v1898 = vmin.f32 %v1834, 6.0
    %v1899 = vmin.f32 %v1835, 6.0
    %v1900 = vmin.f32 %v1836, 6.0
    %v1901 = vmin.f32 %v1837, 6.0
    %v1902 = vmin.f32 %v1838, 6.0
    %v1903 = vmin.f32 %v1839, 6.0
    %v1904 = vmin.f32 %v1840, 6.0
    %v1905 = vmin.f32 %v1841, 6.0
    %v1906 = vmin.f32 %v1842, 6.0
    %v1907 = vmin.f32 %v1843, 6.0
    %v1908 = vmin.f32 %v1844, 6.0
    %v1909 = vmin.f32 %v1845, 6.0
    %v1910 = vmin.f32 %v1846, 6.0
    %v1911 = vmin.f32 %v1847, 6.0
    %v1912 = vmin.f32 %v1848, 6.0
    %v1913 = vmin.f32 %v1849, 6.0
    %v1914 = vmin.f32 %v1850, 6.0
    %v1915 = vmin.f32 %v1851, 6.0
    %v1916 = vmin.f32 %v1852, 6.0
    %v1917 = vmin.f32 %v1853, 6.0
    %v1918 = vmin.f32 %v1854, 6.0
    %v1919 = vmin.f32 %v1855, 6.0
    %v1920 = vmin.f32 %v1856, 6.0
    %v1921 = vmin.f32 %v1857, 6.0
    %v1922 = vmin.f32 %v1858, 6.0
    %v1923 = vmin.f32 %v1859, 6.0
    %v1924 = vmin.f32 %v1860, 6.0
    %v1925 = vmin.f32 %v1861, 6.0
    %v1926 = vmin.f32 %v1862, 6.0
    %v1927 = vmul.f32 %v1671, %v1863
    %v1928 = vmul.f32 %v1672, %v1864
    %v1929 = vmul.f32 %v1673, %v1865
    %v1930 = vmul.f32 %v1674, %v1866
    %v1931 = vmul.f32 %v1675, %v1867
    %v1932 = vmul.f32 %v1676, %v1868
    %v1933 = vmul.f32 %v1677, %v1869
    %v1934 = vmul.f32 %v1678, %v1870
    %v1935 = vmul.f32 %v1679, %v1871
    %v1936 = vmul.f32 %v1680, %v1872
    %v1937 = vmul.f32 %v1681, %v1873
    %v1938 = vmul.f32 %v1682, %v1874
    %v1939 = vmul.f32 %v1683, %v1875
    %v1940 = vmul.f32 %v1684, %v1876
    %v1941 = vmul.f32 %v1685, %v1877
    %v1942 = vmul.f32 %v1686, %v1878
    %v1943 = vmul.f32 %v1687, %v1879
    %v1944 = vmul.f32 %v1688, %v1880
    %v1945 = vmul.f32 %v1689, %v1881
    %v1946 = vmul.f32 %v1690, %v1882
    %v1947 = vmul.f32 %v1691, %v1883
    %v1948 = vmul.f32 %v1692, %v1884
    %v1949 = vmul.f32 %v1693, %v1885
    %v1950 = vmul.f32 %v1694, %v1886
    %v1951 = vmul.f32 %v1695, %v1887
    %v1952 = vmul.f32 %v1696, %v1888
    %v1953 = vmul.f32 %v1697, %v1889
    %v1954 = vmul.f32 %v1698, %v1890
    %v1955 = vmul.f32 %v1699, %v1891
    %v1956 = vmul.f32 %v1700, %v1892
    %v1957 = vmul.f32 %v1701, %v1893
    %v1958 = vmul.f32 %v1702, %v1894
    %v1959 = vmul.f32 %v1703, %v1895
    %v1960 = vmul.f32 %v1704, %v1896
    %v1961 = vmul.f32 %v1705, %v1897
    %v1962 = vmul.f32 %v1706, %v1898
    %v1963 = vmul.f32 %v1707, %v1899
    %v1964 = vmul.f32 %v1708, %v1900
    %v1965 = vmul.f32 %v1709, %v1901
    %v1966 = vmul.f32 %v1710, %v1902
    %v1967 = vmul.f32 %v1711, %v1903
    %v1968 = vmul.f32 %v1712, %v1904
    %v1969 = vmul.f32 %v1713, %v1905
    %v1970 = vmul.f32 %v1714, %v1906
    %v1971 = vmul.f32 %v1715, %v1907
    %v1972 = vmul.f32 %v1716, %v1908
    %v1973 = vmul.f32 %v1717, %v1909
    %v1974 = vmul.f32 %v1718, %v1910
    %v1975 = vmul.f32 %v1719, %v1911
    %v1976 = vmul.f32 %v1720, %v1912
    %v1977 = vmul.f32 %v1721, %v1913
    %v1978 = vmul.f32 %v1722, %v1914
    %v1979 = vmul.f32 %v1723, %v1915
    %v1980 = vmul.f32 %v1724, %v1916
    %v1981 = vmul.f32 %v1725, %v1917
    %v1982 = vmul.f32 %v1726, %v1918
    %v1983 = vmul.f32 %v1727, %v1919
    %v1984 = vmul.f32 %v1728, %v1920
    %v1985 = vmul.f32 %v1729, %v1921
    %v1986 = vmul.f32 %v1730, %v1922
    %v1987 = vmul.f32 %v1731, %v1923
    %v1988 = vmul.f32 %v1732, %v1924
    %v1989 = vmul.f32 %v1733, %v1925
    %v1990 = vmul.f32 %v1734, %v1926
    %v1991 = vmul.f32 %v1927, 0.16666667
    %v1992 = vmul.f32 %v1928, 0.16666667
    %v1993 = vmul.f32 %v1929, 0.16666667
    %v1994 = vmul.f32 %v1930, 0.16666667
    %v1995 = vmul.f32 %v1931, 0.16666667
    %v1996 = vmul.f32 %v1932, 0.16666667
    %v1997 = vmul.f32 %v1933, 0.16666667
    %v1998 = vmul.f32 %v1934, 0.16666667
    %v1999 = vmul.f32 %v1935, 0.16666667
    %v2000 = vmul.f32 %v1936, 0.16666667
    %v2001 = vmul.f32 %v1937, 0.16666667
    %v2002 = vmul.f32 %v1938, 0.16666667
    %v2003 = vmul.f32 %v1939, 0.16666667
    %v2004 = vmul.f32 %v1940, 0.16666667
    %v2005 = vmul.f32 %v1941, 0.16666667
    %v2006 = vmul.f32 %v1942, 0.16666667
    %v2007 = vmul.f32 %v1943, 0.16666667
    %v2008 = vmul.f32 %v1944, 0.16666667
    %v2009 = vmul.f32 %v1945, 0.16666667
    %v2010 = vmul.f32 %v1946, 0.16666667
    %v2011 = vmul.f32 %v1947, 0.16666667
    %v2012 = vmul.f32 %v1948, 0.16666667
    %v2013 = vmul.f32 %v1949, 0.16666667
    %v2014 = vmul.f32 %v1950, 0.16666667
    %v2015 = vmul.f32 %v1951, 0.16666667
    %v2016 = vmul.f32 %v1952, 0.16666667
    %v2017 = vmul.f32 %v1953, 0.16666667
    %v2018 = vmul.f32 %v1954, 0.16666667
    %v2019 = vmul.f32 %v1955, 0.16666667
    %v2020 = vmul.f32 %v1956, 0.16666667
    %v2021 = vmul.f32 %v1957, 0.16666667
    %v2022 = vmul.f32 %v1958, 0.16666667
    %v2023 = vmul.f32 %v1959, 0.16666667
    %v2024 = vmul.f32 %v1960, 0.16666667
    %v2025 = vmul.f32 %v1961, 0.16666667
    %v2026 = vmul.f32 %v1962, 0.16666667
    %v2027 = vmul.f32 %v1963, 0.16666667
    %v2028 = vmul.f32 %v1964, 0.16666667
    %v2029 = vmul.f32 %v1965, 0.16666667
    %v2030 = vmul.f32 %v1966, 0.16666667
    %v2031 = vmul.f32 %v1967, 0.16666667
    %v2032 = vmul.f32 %v1968, 0.16666667
    %v2033 = vmul.f32 %v1969, 0.16666667
    %v2034 = vmul.f32 %v1970, 0.16666667
    %v2035 = vmul.f32 %v1971, 0.16666667
    %v2036 = vmul.f32 %v1972, 0.16666667
    %v2037 = vmul.f32 %v1973, 0.16666667
    %v2038 = vmul.f32 %v1974, 0.16666667
    %v2039 = vmul.f32 %v1975, 0.16666667
    %v2040 = vmul.f32 %v1976, 0.16666667
    %v2041 = vmul.f32 %v1977, 0.16666667
    %v2042 = vmul.f32 %v1978, 0.16666667
    %v2043 = vmul.f32 %v1979, 0.16666667
    %v2044 = vmul.f32 %v1980, 0.16666667
    %v2045 = vmul.f32 %v1981, 0.16666667
    %v2046 = vmul.f32 %v1982, 0.16666667
    %v2047 = vmul.f32 %v1983, 0.16666667
    %v2048 = vmul.f32 %v1984, 0.16666667
    %v2049 = vmul.f32 %v1985, 0.16666667
    %v2050 = vmul.f32 %v1986, 0.16666667
    %v2051 = vmul.f32 %v1987, 0.16666667
    %v2052 = vmul.f32 %v1988, 0.16666667
    %v2053 = vmul.f32 %v1989, 0.16666667
    %v2054 = vmul.f32 %v1990, 0.16666667
    %v2055 = vpack.c.bf16 %v1992, %v1991
    %v2056 = vpack.c.bf16 %v1994, %v1993
    %v2057 = vpack.c.bf16 %v1996, %v1995
    %v2058 = vpack.c.bf16 %v1998, %v1997
    %v2059 = vpack.c.bf16 %v2000, %v1999
    %v2060 = vpack.c.bf16 %v2002, %v2001
    %v2061 = vpack.c.bf16 %v2004, %v2003
    %v2062 = vpack.c.bf16 %v2006, %v2005
    %v2063 = vpack.c.bf16 %v2008, %v2007
    %v2064 = vpack.c.bf16 %v2010, %v2009
    %v2065 = vpack.c.bf16 %v2012, %v2011
    %v2066 = vpack.c.bf16 %v2014, %v2013
    %v2067 = vpack.c.bf16 %v2016, %v2015
    %v2068 = vpack.c.bf16 %v2018, %v2017
    %v2069 = vpack.c.bf16 %v2020, %v2019
    %v2070 = vpack.c.bf16 %v2022, %v2021
    %v2071 = vpack.c.bf16 %v2024, %v2023
    %v2072 = vpack.c.bf16 %v2026, %v2025
    %v2073 = vpack.c.bf16 %v2028, %v2027
    %v2074 = vpack.c.bf16 %v2030, %v2029
    %v2075 = vpack.c.bf16 %v2032, %v2031
    %v2076 = vpack.c.bf16 %v2034, %v2033
    %v2077 = vpack.c.bf16 %v2036, %v2035
    %v2078 = vpack.c.bf16 %v2038, %v2037
    %v2079 = vpack.c.bf16 %v2040, %v2039
    %v2080 = vpack.c.bf16 %v2042, %v2041
    %v2081 = vpack.c.bf16 %v2044, %v2043
    %v2082 = vpack.c.bf16 %v2046, %v2045
    %v2083 = vpack.c.bf16 %v2048, %v2047
    %v2084 = vpack.c.bf16 %v2050, %v2049
    %v2085 = vpack.c.bf16 %v2052, %v2051
    %v2086 = vpack.c.bf16 %v2054, %v2053
    %v2119 = vunpack.c.l.b16 %v2055
    %v2120 = vunpack.c.h.b16 %v2055
    %v2121 = vunpack.c.l.b16 %v2056
    %v2122 = vunpack.c.h.b16 %v2056
    %v2123 = vunpack.c.l.b16 %v2057
    %v2124 = vunpack.c.h.b16 %v2057
    %v2125 = vunpack.c.l.b16 %v2058
    %v2126 = vunpack.c.h.b16 %v2058
    %v2127 = vunpack.c.l.b16 %v2059
    %v2128 = vunpack.c.h.b16 %v2059
    %v2129 = vunpack.c.l.b16 %v2060
    %v2130 = vunpack.c.h.b16 %v2060
    %v2131 = vunpack.c.l.b16 %v2061
    %v2132 = vunpack.c.h.b16 %v2061
    %v2133 = vunpack.c.l.b16 %v2062
    %v2134 = vunpack.c.h.b16 %v2062
    %v2135 = vunpack.c.l.b16 %v2063
    %v2136 = vunpack.c.h.b16 %v2063
    %v2137 = vunpack.c.l.b16 %v2064
    %v2138 = vunpack.c.h.b16 %v2064
    %v2139 = vunpack.c.l.b16 %v2065
    %v2140 = vunpack.c.h.b16 %v2065
    %v2141 = vunpack.c.l.b16 %v2066
    %v2142 = vunpack.c.h.b16 %v2066
    %v2143 = vunpack.c.l.b16 %v2067
    %v2144 = vunpack.c.h.b16 %v2067
    %v2145 = vunpack.c.l.b16 %v2068
    %v2146 = vunpack.c.h.b16 %v2068
    %v2147 = vunpack.c.l.b16 %v2069
    %v2148 = vunpack.c.h.b16 %v2069
    %v2149 = vunpack.c.l.b16 %v2070
    %v2150 = vunpack.c.h.b16 %v2070
    %v2151 = vunpack.c.l.b16 %v2071
    %v2152 = vunpack.c.h.b16 %v2071
    %v2153 = vunpack.c.l.b16 %v2072
    %v2154 = vunpack.c.h.b16 %v2072
    %v2155 = vunpack.c.l.b16 %v2073
    %v2156 = vunpack.c.h.b16 %v2073
    %v2157 = vunpack.c.l.b16 %v2074
    %v2158 = vunpack.c.h.b16 %v2074
    %v2159 = vunpack.c.l.b16 %v2075
    %v2160 = vunpack.c.h.b16 %v2075
    %v2161 = vunpack.c.l.b16 %v2076
    %v2162 = vunpack.c.h.b16 %v2076
    %v2163 = vunpack.c.l.b16 %v2077
    %v2164 = vunpack.c.h.b16 %v2077
    %v2165 = vunpack.c.l.b16 %v2078
    %v2166 = vunpack.c.h.b16 %v2078
    %v2167 = vunpack.c.l.b16 %v2079
    %v2168 = vunpack.c.h.b16 %v2079
    %v2169 = vunpack.c.l.b16 %v2080
    %v2170 = vunpack.c.h.b16 %v2080
    %v2171 = vunpack.c.l.b16 %v2081
    %v2172 = vunpack.c.h.b16 %v2081
    %v2173 = vunpack.c.l.b16 %v2082
    %v2174 = vunpack.c.h.b16 %v2082
    %v2175 = vunpack.c.l.b16 %v2083
    %v2176 = vunpack.c.h.b16 %v2083
    %v2177 = vunpack.c.l.b16 %v2084
    %v2178 = vunpack.c.h.b16 %v2084
    %v2179 = vunpack.c.l.b16 %v2085
    %v2180 = vunpack.c.h.b16 %v2085
    %v2181 = vunpack.c.l.b16 %v2086
    %v2182 = vunpack.c.h.b16 %v2086
    %v2183 = vpack.c.b16 %v2119, %v2119
    %v2184 = vpack.c.b16 %v2120, %v2120
    %v2185 = vpack.c.b16 %v2121, %v2121
    %v2186 = vpack.c.b16 %v2122, %v2122
    %v2187 = vpack.c.b16 %v2123, %v2123
    %v2188 = vpack.c.b16 %v2124, %v2124
    %v2189 = vpack.c.b16 %v2125, %v2125
    %v2190 = vpack.c.b16 %v2126, %v2126
    %v2191 = vpack.c.b16 %v2127, %v2127
    %v2192 = vpack.c.b16 %v2128, %v2128
    %v2193 = vpack.c.b16 %v2129, %v2129
    %v2194 = vpack.c.b16 %v2130, %v2130
    %v2195 = vpack.c.b16 %v2131, %v2131
    %v2196 = vpack.c.b16 %v2132, %v2132
    %v2197 = vpack.c.b16 %v2133, %v2133
    %v2198 = vpack.c.b16 %v2134, %v2134
    %v2199 = vpack.c.b16 %v2135, %v2135
    %v2200 = vpack.c.b16 %v2136, %v2136
    %v2201 = vpack.c.b16 %v2137, %v2137
    %v2202 = vpack.c.b16 %v2138, %v2138
    %v2203 = vpack.c.b16 %v2139, %v2139
    %v2204 = vpack.c.b16 %v2140, %v2140
    %v2205 = vpack.c.b16 %v2141, %v2141
    %v2206 = vpack.c.b16 %v2142, %v2142
    %v2207 = vpack.c.b16 %v2143, %v2143
    %v2208 = vpack.c.b16 %v2144, %v2144
    %v2209 = vpack.c.b16 %v2145, %v2145
    %v2210 = vpack.c.b16 %v2146, %v2146
    %v2211 = vpack.c.b16 %v2147, %v2147
    %v2212 = vpack.c.b16 %v2148, %v2148
    %v2213 = vpack.c.b16 %v2149, %v2149
    %v2214 = vpack.c.b16 %v2150, %v2150
    %v2215 = vpack.c.b16 %v2151, %v2151
    %v2216 = vpack.c.b16 %v2152, %v2152
    %v2217 = vpack.c.b16 %v2153, %v2153
    %v2218 = vpack.c.b16 %v2154, %v2154
    %v2219 = vpack.c.b16 %v2155, %v2155
    %v2220 = vpack.c.b16 %v2156, %v2156
    %v2221 = vpack.c.b16 %v2157, %v2157
    %v2222 = vpack.c.b16 %v2158, %v2158
    %v2223 = vpack.c.b16 %v2159, %v2159
    %v2224 = vpack.c.b16 %v2160, %v2160
    %v2225 = vpack.c.b16 %v2161, %v2161
    %v2226 = vpack.c.b16 %v2162, %v2162
    %v2227 = vpack.c.b16 %v2163, %v2163
    %v2228 = vpack.c.b16 %v2164, %v2164
    %v2229 = vpack.c.b16 %v2165, %v2165
    %v2230 = vpack.c.b16 %v2166, %v2166
    %v2231 = vpack.c.b16 %v2167, %v2167
    %v2232 = vpack.c.b16 %v2168, %v2168
    %v2233 = vpack.c.b16 %v2169, %v2169
    %v2234 = vpack.c.b16 %v2170, %v2170
    %v2235 = vpack.c.b16 %v2171, %v2171
    %v2236 = vpack.c.b16 %v2172, %v2172
    %v2237 = vpack.c.b16 %v2173, %v2173
    %v2238 = vpack.c.b16 %v2174, %v2174
    %v2239 = vpack.c.b16 %v2175, %v2175
    %v2240 = vpack.c.b16 %v2176, %v2176
    %v2241 = vpack.c.b16 %v2177, %v2177
    %v2242 = vpack.c.b16 %v2178, %v2178
    %v2243 = vpack.c.b16 %v2179, %v2179
    %v2244 = vpack.c.b16 %v2180, %v2180
    %v2245 = vpack.c.b16 %v2181, %v2181
    %v2246 = vpack.c.b16 %v2182, %v2182
    %2311 = vst [vmem:[#allocation4] sm:$0xf] %v2183
    %2312 = vst [vmem:[#allocation4 + $0x4] sm:$0xf] %v2184
    %2313 = vst [vmem:[#allocation4 + $0x8] sm:$0xf] %v2185
    %2314 = vst [vmem:[#allocation4 + $0xc] sm:$0xf] %v2186
    %2315 = vst [vmem:[#allocation4 + $0x10] sm:$0xf] %v2187
    %2316 = vst [vmem:[#allocation4 + $0x14] sm:$0xf] %v2188
    %2317 = vst [vmem:[#allocation4 + $0x18] sm:$0xf] %v2189
    %2318 = vst [vmem:[#allocation4 + $0x1c] sm:$0xf] %v2190
    %2319 = vst [vmem:[#allocation4 + $0x20] sm:$0xf] %v2191
    %2320 = vst [vmem:[#allocation4 + $0x24] sm:$0xf] %v2192
    %2321 = vst [vmem:[#allocation4 + $0x28] sm:$0xf] %v2193
    %2322 = vst [vmem:[#allocation4 + $0x2c] sm:$0xf] %v2194
    %2323 = vst [vmem:[#allocation4 + $0x30] sm:$0xf] %v2195
    %2324 = vst [vmem:[#allocation4 + $0x34] sm:$0xf] %v2196
    %2325 = vst [vmem:[#allocation4 + $0x38] sm:$0xf] %v2197
    %2326 = vst [vmem:[#allocation4 + $0x3c] sm:$0xf] %v2198
    %2327 = vst [vmem:[#allocation4 + $0x40] sm:$0xf] %v2199
    %2328 = vst [vmem:[#allocation4 + $0x44] sm:$0xf] %v2200
    %2329 = vst [vmem:[#allocation4 + $0x48] sm:$0xf] %v2201
    %2330 = vst [vmem:[#allocation4 + $0x4c] sm:$0xf] %v2202
    %2331 = vst [vmem:[#allocation4 + $0x50] sm:$0xf] %v2203
    %2332 = vst [vmem:[#allocation4 + $0x54] sm:$0xf] %v2204
    %2333 = vst [vmem:[#allocation4 + $0x58] sm:$0xf] %v2205
    %2334 = vst [vmem:[#allocation4 + $0x5c] sm:$0xf] %v2206
    %2335 = vst [vmem:[#allocation4 + $0x60] sm:$0xf] %v2207
    %2336 = vst [vmem:[#allocation4 + $0x64] sm:$0xf] %v2208
    %2337 = vst [vmem:[#allocation4 + $0x68] sm:$0xf] %v2209
    %2338 = vst [vmem:[#allocation4 + $0x6c] sm:$0xf] %v2210
    %2339 = vst [vmem:[#allocation4 + $0x70] sm:$0xf] %v2211
    %2340 = vst [vmem:[#allocation4 + $0x74] sm:$0xf] %v2212
    %2341 = vst [vmem:[#allocation4 + $0x78] sm:$0xf] %v2213
    %2342 = vst [vmem:[#allocation4 + $0x7c] sm:$0xf] %v2214
    %2343 = vst [vmem:[#allocation4 + $0x80] sm:$0xf] %v2215
    %2344 = vst [vmem:[#allocation4 + $0x84] sm:$0xf] %v2216
    %2345 = vst [vmem:[#allocation4 + $0x88] sm:$0xf] %v2217
    %2346 = vst [vmem:[#allocation4 + $0x8c] sm:$0xf] %v2218
    %2347 = vst [vmem:[#allocation4 + $0x90] sm:$0xf] %v2219
    %2348 = vst [vmem:[#allocation4 + $0x94] sm:$0xf] %v2220
    %2349 = vst [vmem:[#allocation4 + $0x98] sm:$0xf] %v2221
    %2350 = vst [vmem:[#allocation4 + $0x9c] sm:$0xf] %v2222
    %2351 = vst [vmem:[#allocation4 + $0xa0] sm:$0xf] %v2223
    %2352 = vst [vmem:[#allocation4 + $0xa4] sm:$0xf] %v2224
    %2353 = vst [vmem:[#allocation4 + $0xa8] sm:$0xf] %v2225
    %2354 = vst [vmem:[#allocation4 + $0xac] sm:$0xf] %v2226
    %2355 = vst [vmem:[#allocation4 + $0xb0] sm:$0xf] %v2227
    %2356 = vst [vmem:[#allocation4 + $0xb4] sm:$0xf] %v2228
    %2357 = vst [vmem:[#allocation4 + $0xb8] sm:$0xf] %v2229
    %2358 = vst [vmem:[#allocation4 + $0xbc] sm:$0xf] %v2230
    %2359 = vst [vmem:[#allocation4 + $0xc0] sm:$0xf] %v2231
    %2360 = vst [vmem:[#allocation4 + $0xc4] sm:$0xf] %v2232
    %2361 = vst [vmem:[#allocation4 + $0xc8] sm:$0xf] %v2233
    %2362 = vst [vmem:[#allocation4 + $0xcc] sm:$0xf] %v2234
    %2363 = vst [vmem:[#allocation4 + $0xd0] sm:$0xf] %v2235
    %2364 = vst [vmem:[#allocation4 + $0xd4] sm:$0xf] %v2236
    %2365 = vst [vmem:[#allocation4 + $0xd8] sm:$0xf] %v2237
    %2366 = vst [vmem:[#allocation4 + $0xdc] sm:$0xf] %v2238
    %2367 = vst [vmem:[#allocation4 + $0xe0] sm:$0xf] %v2239
    %2368 = vst [vmem:[#allocation4 + $0xe4] sm:$0xf] %v2240
    %2369 = vst [vmem:[#allocation4 + $0xe8] sm:$0xf] %v2241
    %2370 = vst [vmem:[#allocation4 + $0xec] sm:$0xf] %v2242
    %2371 = vst [vmem:[#allocation4 + $0xf0] sm:$0xf] %v2243
    %2372 = vst [vmem:[#allocation4 + $0xf4] sm:$0xf] %v2244
    %2373 = vst [vmem:[#allocation4 + $0xf8] sm:$0xf] %v2245
    %2374 = vst [vmem:[#allocation4 + $0xfc] sm:$0xf] %v2246
    // Predicated region
    $region30: #{tpu_custom_call.1} parent=1 // pred_check
      _
    $region31: #{tpu_custom_call.1} parent=1 // pred_check_branch
      %2376 = sbr.rel (0) target = $region33
    $region32: #{tpu_custom_call.1} parent=1 // pred_region
      %s2378 = ssub.s32 4096, 4096
      %2379 = vsyncadd [#allocation3], %s2378
      %s2380 = sshll.u32 [#allocation2], 4
      %s2381 = int_to_ptr.vmem [resolvable:$true] %s2380
      %2386 = dma.vmem_to_hbm [thread:$0]  %s2381, 4096, %s7, [#allocation3], 64, 64, 4
    $region33: #{tpu_custom_call.1} parent=1 // pred_fallthru
      _
    // Predicated region
    $region34: #{tpu_custom_call.1} parent=1 // pred_check
      _
    $region35: #{tpu_custom_call.1} parent=1 // pred_check_branch
      %2388 = sbr.rel (0) target = $region37
    $region36: #{tpu_custom_call.1} parent=1 // pred_region
      %s2390 = ssub.s32 4096, 4096
      %2391 = vsyncadd [#allocation5], %s2390
      %s2392 = sshll.u32 [#allocation4], 4
      %s2393 = int_to_ptr.vmem [resolvable:$true] %s2392
      %2398 = dma.vmem_to_hbm [thread:$0]  %s2393, 4096, %s8, [#allocation5], 64, 64, 4
    $region37: #{tpu_custom_call.1} parent=1 // pred_fallthru
      _
    // Predicated region
    $region38: #{tpu_custom_call.1} parent=1 // pred_check
      _
    $region39: #{tpu_custom_call.1} parent=1 // pred_check_branch
      %2400 = sbr.rel (0) target = $region41
    $region40: #{tpu_custom_call.1} parent=1 // pred_region
      %2401 = dma.done [#allocation3], 4096
    $region41: #{tpu_custom_call.1} parent=1 // pred_fallthru
      _
    // Predicated region
    $region42: #{tpu_custom_call.1} parent=1 // pred_check
      _
    $region43: #{tpu_custom_call.1} parent=1 // pred_check_branch
      %2403 = sbr.rel (0) target = $region45
    $region44: #{tpu_custom_call.1} parent=1 // pred_region
      %2404 = dma.done [#allocation5], 4096
    $region45: #{tpu_custom_call.1} parent=1 // pred_fallthru
      _
    %2405 = vsyncpa [#allocation3], 1
    %2406 = vsyncpa [#allocation5], 1

</llo_original>
